<compile_context>
chip_gen: v7x
topology: tpu7x:2x2x1
jax: 0.10.0
libtpu: 0.0.40
codegen_flags: <defaults>
</compile_context>

<pallas_src>
import functools

import jax
import jax.numpy as jnp
from jax.experimental import pallas as pl
from jax.experimental.pallas import tpu as pltpu


# --------------------------- in-kernel building blocks ----------------------

def _shift_stack(x_cm, h, w):
    """9-tap shifted stack for a 3x3 / stride-1 / pad-1 cross-correlation.

    x_cm: (Cin, h*w), pixels flattened row-major on the lane axis.
    Returns (9*Cin, h*w): row k*Cin + c holds x[c, p + dh*w + dw] for tap
    k = (dh+1)*3 + (dw+1), zeroed where the source pixel is out of range.
    Vertical out-of-range is covered by the zero pad of the flat pixel axis;
    the row wrap-around of the +-1 horizontal taps is masked on the input
    slabs, so the merged (Cout, 9*Cin) @ (9*Cin, h*w) matmul is exact.
    """
    hw = h * w
    cin = x_cm.shape[0]
    pad = w + 1

    zeros = jnp.zeros((cin, pad), x_cm.dtype)
    xpad = jnp.concatenate([zeros, x_cm, zeros], axis=1)     # (Cin, hw + 2(w+1))

    # hoisted: column iota and full-size masks built once (no per-tap rebroadcast)
    col = jax.lax.broadcasted_iota(jnp.int32, (1, hw), 1) % w
    m_left = jnp.broadcast_to(col >= 1, (cin, hw))           # source col w-1 exists
    m_right = jnp.broadcast_to(col <= w - 2, (cin, hw))      # source col w+1 exists

    slabs = []
    for dh in (-1, 0, 1):
        for dw in (-1, 0, 1):
            start = pad + dh * w + dw
            s = xpad[:, start:start + hw]                    # (Cin, hw)
            if dw == -1:
                s = jnp.where(m_left, s, 0).astype(x_cm.dtype)
            elif dw == 1:
                s = jnp.where(m_right, s, 0).astype(x_cm.dtype)
            slabs.append(s)
    return jnp.concatenate(slabs, axis=0)                    # (9*Cin, hw)


def _octave_fused_kernel(H, W, c_hi, c_l2h,
                         x_ref, w_h_ref, b_h_ref, w_low_ref, b_low_ref,
                         pk_ref, uk_ref, oh_ref, ol_ref):
    # x_ref   : (1, C, H*W) bf16, one batch element, channels-major
    # w_h_ref : (c_hh, 9*c_hi) bf16 merged-tap h2h weight;  b_h_ref: (c_hh, 1) f32
    # w_low_ref: (c_l2h + c_lo, 9*C) bf16 merged-tap weight for the three
    #           low-res convs over the jointly pooled channels [X_h ; X_l];
    #           rows [c_l2h:] already sum l2l and h2l.  b_low_ref: f32.
    # pk_ref  : (H*W, Hp*Wp) bf16 avg-pool matrix (right-multiply on pixels)
    # uk_ref  : (Hp*Wp, H*W) bf16 bilinear align_corners upsample matrix
    Hp, Wp = H // 2, W // 2

    x = x_ref[0]                                   # (C, H*W) bf16
    x_h = x[:c_hi]                                 # (64, H*W)

    # 2x2 avg-pool of ALL channels (pool(X_l) and pool(X_h) -> X_h2l) in one
    # matmul on the pixel axis; cast back to bf16 as the conv MXU operand.
    x_pool = jnp.dot(x, pk_ref[...],
                     preferred_element_type=jnp.float32).astype(jnp.bfloat16)

    # h2h: one MXU matmul over the 9-tap stacked high-res input.
    hs = _shift_stack(x_h, H, W)                   # (9*64, H*W)
    acc_h = jnp.dot(w_h_ref[...], hs,
                    preferred_element_type=jnp.float32) + b_h_ref[...]

    # l2h + l2l + h2l: one stack, one matmul; l2l + h2l add folded into the
    # shared output rows (and biases) of the merged weight.
    ls = _shift_stack(x_pool, Hp, Wp)              # (9*C, Hp*Wp)
    acc_l = jnp.dot(w_low_ref[...], ls,
                    preferred_element_type=jnp.float32) + b_low_ref[...]

    # bilinear x2 upsample (align_corners=True) of the l2h rows as one matmul.
    up = jnp.dot(acc_l[:c_l2h].astype(jnp.bfloat16), uk_ref[...],
                 preferred_element_type=jnp.float32)          # (c_hh, H*W)

    oh_ref[...] = (up + acc_h)[None].astype(oh_ref.dtype)
    ol_ref[...] = acc_l[c_l2h:][None].astype(ol_ref.dtype)


# ------------------------- host-side resampling matrices --------------------

def avg_pool2_matrix(n):
    n2 = n // 2
    rows = jnp.arange(n2)
    m = jnp.zeros((n2, n), jnp.float32)
    m = m.at[rows, 2 * rows].set(0.5)
    m = m.at[rows, 2 * rows + 1].set(0.5)
    return m


def bilinear_align_corners_matrix(n_in, n_out):
    # out[i] = sum_p M[i, p] * in[p]   (align_corners=True)
    if n_in == 1:
        return jnp.ones((n_out, 1), jnp.float32)
    src = jnp.arange(n_out, dtype=jnp.float32) * (n_in - 1) / (n_out - 1)
    lo = jnp.clip(jnp.floor(src).astype(jnp.int32), 0, n_in - 2)
    frac = src - lo.astype(jnp.float32)
    rows = jnp.arange(n_out)
    m = jnp.zeros((n_out, n_in), jnp.float32)
    m = m.at[rows, lo].add(1.0 - frac)
    m = m.at[rows, lo + 1].add(frac)
    return m


# -------------------------- OctaveConv2 (forward) ---------------------------

def init_octave_conv2(key, in_channels, out_channels, kernel_size=(3, 3),
                      alpha=0.75):
    k = kernel_size[0]
    lo_in = int(alpha * in_channels)
    hi_in = in_channels - lo_in
    lo_out = int(alpha * out_channels)
    hi_out = out_channels - lo_out

    def conv_init(kk, cout, cin):
        kw_, kb_ = jax.random.split(kk)
        bound = (cin * k * k) ** -0.5
        w = jax.random.uniform(kw_, (cout, cin, k, k), jnp.float32, -bound, bound)
        b = jax.random.uniform(kb_, (cout,), jnp.float32, -bound, bound)
        return w, b

    k1, k2, k3, k4 = jax.random.split(key, 4)
    return {
        "l2l": conv_init(k1, lo_out, lo_in),
        "l2h": conv_init(k2, hi_out, lo_in),
        "h2l": conv_init(k3, lo_out, hi_in),
        "h2h": conv_init(k4, hi_out, hi_in),
    }


def octave_conv2_forward(params, x):
    """x: NCHW float32.  The PyTorch forward hard-codes a 64-channel high split."""
    B, C, H, W = x.shape
    c_hi = 64
    Hp, Wp = H // 2, W // 2
    bf16 = jnp.bfloat16

    w_hh, b_hh = params["h2h"]
    w_l2h, b_l2h = params["l2h"]
    w_l2l, b_l2l = params["l2l"]
    w_hl, b_hl = params["h2l"]

    c_hh = w_hh.shape[0]           # high-res output channels (== l2h out)
    c_l2h = w_l2h.shape[0]
    c_lo = w_l2l.shape[0]          # low-res output channels (== h2l out)

    def pack(w):  # OIHW (Cout, Cin, 3, 3) -> (Cout, 9, Cin); tap k = kh*3 + kw
        co, ci = w.shape[0], w.shape[1]
        return jnp.transpose(w, (0, 2, 3, 1)).reshape(co, 9, ci)

    # h2h merged-tap weight: (c_hh, 9*c_hi).
    w_high = pack(w_hh).reshape(c_hh, 9 * c_hi).astype(bf16)
    b_high = b_hh.reshape(-1, 1)

    # The three low-res convs share the jointly pooled input
    # [pool(X_h) (c_hi ch) ; pool(X_l) (C-c_hi ch)].  Block-structured merged
    # weight; l2l and h2l write the same output rows, so their residual add
    # and bias add are folded into the single matmul.
    w_low = jnp.zeros((c_l2h + c_lo, 9, C), jnp.float32)
    w_low = w_low.at[:c_l2h, :, c_hi:].set(pack(w_l2h))
    w_low = w_low.at[c_l2h:, :, c_hi:].set(pack(w_l2l))
    w_low = w_low.at[c_l2h:, :, :c_hi].set(pack(w_hl))
    w_low = w_low.reshape(c_l2h + c_lo, 9 * C).astype(bf16)
    b_low = jnp.concatenate([b_l2h, b_l2l + b_hl]).reshape(-1, 1)

    # Kronecker resampling matrices acting on the flattened pixel axis
    # (pool entries of 0.25 are exact in bf16; bilinear fractions round).
    # TODO(synk): for large H, W switch to separable row/column resampling so
    # pk/uk (which scale as (H*W)x(Hp*Wp)) stay within the v7x 64 MiB VMEM.
    pk = jnp.kron(avg_pool2_matrix(H), avg_pool2_matrix(W)).T     # (H*W, Hp*Wp)
    uh = bilinear_align_corners_matrix(Hp, 2 * Hp)
    uw = bilinear_align_corners_matrix(Wp, 2 * Wp)
    if (2 * Hp, 2 * Wp) != (H, W):
        # odd-size fixup: compose the x2 upsample with the resize-to-target,
        # exactly mirroring PyTorch's upsample -> F.interpolate sequence.
        uh = bilinear_align_corners_matrix(2 * Hp, H) @ uh
        uw = bilinear_align_corners_matrix(2 * Wp, W) @ uw
    uk = jnp.kron(uh, uw).T                                       # (Hp*Wp, H*W)
    pk, uk = pk.astype(bf16), uk.astype(bf16)

    x_flat = x.reshape(B, C, H * W).astype(bf16)   # bf16 MXU operand, half DMA

    out_h, out_l = pl.pallas_call(
        functools.partial(_octave_fused_kernel, H, W, c_hi, c_l2h),
        out_shape=(jax.ShapeDtypeStruct((B, c_hh, H * W), jnp.float32),
                   jax.ShapeDtypeStruct((B, c_lo, Hp * Wp), jnp.float32)),
        grid=(B,),
        in_specs=[
            pl.BlockSpec((1, C, H * W), lambda i: (i, 0, 0)),
            pl.BlockSpec((c_hh, 9 * c_hi), lambda i: (0, 0)),
            pl.BlockSpec((c_hh, 1), lambda i: (0, 0)),
            pl.BlockSpec((c_l2h + c_lo, 9 * C), lambda i: (0, 0)),
            pl.BlockSpec((c_l2h + c_lo, 1), lambda i: (0, 0)),
            pl.BlockSpec((H * W, Hp * Wp), lambda i: (0, 0)),
            pl.BlockSpec((Hp * Wp, H * W), lambda i: (0, 0)),
        ],
        out_specs=(pl.BlockSpec((1, c_hh, H * W), lambda i: (i, 0, 0)),
                   pl.BlockSpec((1, c_lo, Hp * Wp), lambda i: (i, 0, 0))),
        compiler_params=pltpu.CompilerParams(
            dimension_semantics=("parallel",)),    # batch axis -> v7x megacore
    )(x_flat, w_high, b_high, w_low, b_low, pk, uk)

    return (out_h.reshape(B, c_hh, H, W),
            out_l.reshape(B, c_lo, Hp, Wp))


# ------------------------------ reference -----------------------------------

def _reference(params, x):
    def pool(z):
        B, C, H, W = z.shape
        return z.reshape(B, C, H // 2, 2, W // 2, 2).mean(axis=(3, 5))

    def conv(z, w, b):
        out = jax.lax.conv_general_dilated(
            z, w, window_strides=(1, 1), padding=((1, 1), (1, 1)),
            dimension_numbers=("NCHW", "OIHW", "NCHW"),
            precision=jax.lax.Precision.HIGHEST)
        return out + b[None, :, None, None]

    def upsample(z):
        mh = bilinear_align_corners_matrix(z.shape[2], 2 * z.shape[2])
        mw = bilinear_align_corners_matrix(z.shape[3], 2 * z.shape[3])
        return jnp.einsum("ip,bcpq,jq->bcij", mh, z, mw,
                          precision=jax.lax.Precision.HIGHEST)

    X_h, X_l = x[:, :64, :, :], x[:, 64:, :, :]
    X_l = pool(X_l)
    X_h2l = pool(X_h)
    X_h2h = conv(X_h, *params["h2h"])
    X_l2h = conv(X_l, *params["l2h"])
    X_l2l = conv(X_l, *params["l2l"])
    X_h2l = conv(X_h2l, *params["h2l"])
    X_l2h = upsample(X_l2h)
    return X_l2h + X_h2h, X_h2l + X_l2l


# --------------------------------- main --------------------------------------

if __name__ == "__main__":
    key = jax.random.PRNGKey(0)
    kx, kp = jax.random.split(key)

    # forward hard-codes a 64-channel high split, so with alpha=0.75 the
    # smallest consistent in_channels is 256; out_channels kept small.
    in_channels, out_channels, alpha = 256, 16, 0.75
    x = jax.random.normal(kx, (2, in_channels, 16, 16), jnp.float32)
    params = init_octave_conv2(kp, in_channels, out_channels,
                               kernel_size=(3, 3), alpha=alpha)

    # Pre-round inputs and weights to bf16-representable values so the kernel
    # (bf16 MXU operands, f32 accumulation) and the f32 reference see identical
    # operand values; remaining differences are intermediate rounding and
    # accumulation order only.
    _q = lambda t: jax.tree_util.tree_map(
        lambda a: a.astype(jnp.bfloat16).astype(jnp.float32), t)
    x, params = _q(x), _q(params)

    fwd = jax.jit(functools.partial(octave_conv2_forward, params))
    X_h, X_l = fwd(x)
    jax.block_until_ready((X_h, X_l))

    hi_out = out_channels - int(alpha * out_channels)
    lo_out = int(alpha * out_channels)
    assert X_h.shape == (2, hi_out, 16, 16), X_h.shape
    assert X_l.shape == (2, lo_out, 8, 8), X_l.shape

    ref_h, ref_l = _reference(params, x)
    # tolerance sized for bf16 MXU operands / bf16 intermediates vs f32 reference
    assert jnp.allclose(X_h, ref_h, rtol=1e-2, atol=1e-2), \
        float(jnp.max(jnp.abs(X_h - ref_h)))
    assert jnp.allclose(X_l, ref_l, rtol=1e-2, atol=1e-2), \
        float(jnp.max(jnp.abs(X_l - ref_l)))

    print("KERNEL_OK")
</pallas_src>

<mosaic_0001>
module attributes {stable_mosaic.version = 11 : i64} {
  func.func private @main(%arg0: i32) attributes {dimension_semantics = [#tpu.dimension_semantics<core_parallel>], iteration_bounds = array<i64: 2>, tpu.core_type = #tpu.core_type<sc_scalar_subcore>, window_params = []} {
    return
  }
}

module attributes {stable_mosaic.version = 11 : i64} {
  func.func private @main(%arg0: i32) attributes {dimension_semantics = [#tpu.dimension_semantics<core_parallel>], iteration_bounds = array<i64: 2>, tpu.core_type = #tpu.core_type<sc_scalar_subcore>, window_params = []} {
    return
  }
}

module attributes {stable_mosaic.version = 11 : i64} {
  func.func @_octave_fused_kernel(%arg0: i32, %arg1: memref<1x256x256xbf16, #tpu.memory_space<vmem>>, %arg2: memref<4x576xbf16, #tpu.memory_space<vmem>>, %arg3: memref<4x1xf32, #tpu.memory_space<vmem>>, %arg4: memref<16x2304xbf16, #tpu.memory_space<vmem>>, %arg5: memref<16x1xf32, #tpu.memory_space<vmem>>, %arg6: memref<256x64xbf16, #tpu.memory_space<vmem>>, %arg7: memref<64x256xbf16, #tpu.memory_space<vmem>>, %arg8: memref<1x4x256xf32, #tpu.memory_space<vmem>>, %arg9: memref<1x12x64xf32, #tpu.memory_space<vmem>>) attributes {dimension_semantics = [#tpu.dimension_semantics<parallel>], iteration_bounds = array<i64: 2>, scalar_prefetch = 0 : i64, scratch_operands = 0 : i64, tpu.core_type = #tpu.core_type<tc>, window_params = [{transform_indices = @transform_0, window_bounds = array<i64: 1, 256, 256>}, {pipeline_mode = #tpu.pipeline_mode<synchronous>, transform_indices = @transform_1, window_bounds = array<i64: 4, 576>}, {pipeline_mode = #tpu.pipeline_mode<synchronous>, transform_indices = @transform_2, window_bounds = array<i64: 4, 1>}, {pipeline_mode = #tpu.pipeline_mode<synchronous>, transform_indices = @transform_3, window_bounds = array<i64: 16, 2304>}, {pipeline_mode = #tpu.pipeline_mode<synchronous>, transform_indices = @transform_4, window_bounds = array<i64: 16, 1>}, {pipeline_mode = #tpu.pipeline_mode<synchronous>, transform_indices = @transform_5, window_bounds = array<i64: 256, 64>}, {pipeline_mode = #tpu.pipeline_mode<synchronous>, transform_indices = @transform_6, window_bounds = array<i64: 64, 256>}, {transform_indices = @transform_7, window_bounds = array<i64: 1, 4, 256>}, {transform_indices = @transform_8, window_bounds = array<i64: 1, 12, 64>}]} {
    %c0 = arith.constant 0 : index
    %c0_0 = arith.constant 0 : index
    %c0_1 = arith.constant 0 : index
    %0 = vector.load %arg1[%c0, %c0_0, %c0_1] : memref<1x256x256xbf16, #tpu.memory_space<vmem>>, vector<1x256x256xbf16>
    %1 = vector.shape_cast %0 : vector<1x256x256xbf16> to vector<256x256xbf16>
    %2 = vector.extract_strided_slice %1 {offsets = [0, 0], sizes = [64, 256], strides = [1, 1]} : vector<256x256xbf16> to vector<64x256xbf16>
    %c0_2 = arith.constant 0 : index
    %c0_3 = arith.constant 0 : index
    %3 = vector.load %arg6[%c0_2, %c0_3] : memref<256x64xbf16, #tpu.memory_space<vmem>>, vector<256x64xbf16>
    %cst = arith.constant dense<0.000000e+00> : vector<256x64xf32>
    %4 = tpu.matmul %1, %3, %cst {dimension_numbers = #tpu.dot_dimension_numbers<[1], [0], [0], [1], [0, 0, 1, 1], [], []>} : vector<256x256xbf16>, vector<256x64xbf16>, vector<256x64xf32> -> vector<256x64xf32>
    %5 = arith.truncf %4 : vector<256x64xf32> to vector<256x64xbf16>
    %cst_4 = arith.constant 0.000000e+00 : bf16
    %6 = vector.broadcast %cst_4 : bf16 to vector<64x17xbf16>
    %7 = tpu.concatenate %6, %2, %6 in 1 : vector<64x17xbf16>, vector<64x256xbf16>, vector<64x17xbf16> -> vector<64x290xbf16>
    %8 = tpu.iota {dimensions = array<i32: 1>} : vector<1x256xi32>
    %c16_i32 = arith.constant 16 : i32
    %c0_i32 = arith.constant 0 : i32
    %9 = arith.cmpi eq, %c16_i32, %c0_i32 : i32
    %c1_i32 = arith.constant 1 : i32
    %10 = arith.select %9, %c1_i32, %c16_i32 : i32
    %11 = vector.broadcast %10 : i32 to vector<1x256xi32>
    %12 = arith.remsi %8, %11 : vector<1x256xi32>
    %c0_i32_5 = arith.constant 0 : i32
    %13 = vector.broadcast %c0_i32_5 : i32 to vector<1x256xi32>
    %14 = arith.cmpi ne, %12, %13 : vector<1x256xi32>
    %c0_i32_6 = arith.constant 0 : i32
    %15 = vector.broadcast %c0_i32_6 : i32 to vector<1x256xi32>
    %16 = arith.cmpi slt, %12, %15 : vector<1x256xi32>
    %c0_i32_7 = arith.constant 0 : i32
    %17 = arith.cmpi slt, %10, %c0_i32_7 : i32
    %18 = vector.broadcast %17 : i1 to vector<1x256xi1>
    %19 = vector.broadcast %18 : vector<1x256xi1> to vector<1x256xi1>
    %20 = arith.xori %16, %19 : vector<1x256xi1>
    %21 = arith.andi %20, %14 : vector<1x256xi1>
    %22 = vector.broadcast %10 : i32 to vector<1x256xi32>
    %23 = arith.addi %12, %22 : vector<1x256xi32>
    %24 = arith.select %21, %23, %12 : vector<1x256xi1>, vector<1x256xi32>
    %c1_i32_8 = arith.constant 1 : i32
    %25 = vector.broadcast %c1_i32_8 : i32 to vector<1x256xi32>
    %26 = arith.cmpi sge, %24, %25 : vector<1x256xi32>
    %27 = vector.shape_cast %26 : vector<1x256xi1> to vector<1x256xi1>
    %28 = vector.broadcast %27 : vector<1x256xi1> to vector<64x256xi1>
    %c14_i32 = arith.constant 14 : i32
    %29 = vector.broadcast %c14_i32 : i32 to vector<1x256xi32>
    %30 = arith.cmpi sle, %24, %29 : vector<1x256xi32>
    %31 = vector.shape_cast %30 : vector<1x256xi1> to vector<1x256xi1>
    %32 = vector.broadcast %31 : vector<1x256xi1> to vector<64x256xi1>
    %33 = vector.extract_strided_slice %7 {offsets = [0, 0], sizes = [64, 256], strides = [1, 1]} : vector<64x290xbf16> to vector<64x256xbf16>
    %c0_i32_9 = arith.constant 0 : i32
    %34 = arith.sitofp %c0_i32_9 : i32 to bf16
    %35 = vector.broadcast %34 : bf16 to vector<64x256xbf16>
    %36 = arith.select %28, %33, %35 : vector<64x256xi1>, vector<64x256xbf16>
    %37 = vector.extract_strided_slice %7 {offsets = [0, 1], sizes = [64, 256], strides = [1, 1]} : vector<64x290xbf16> to vector<64x256xbf16>
    %38 = vector.extract_strided_slice %7 {offsets = [0, 2], sizes = [64, 256], strides = [1, 1]} : vector<64x290xbf16> to vector<64x256xbf16>
    %c0_i32_10 = arith.constant 0 : i32
    %39 = arith.sitofp %c0_i32_10 : i32 to bf16
    %40 = vector.broadcast %39 : bf16 to vector<64x256xbf16>
    %41 = arith.select %32, %38, %40 : vector<64x256xi1>, vector<64x256xbf16>
    %42 = vector.extract_strided_slice %7 {offsets = [0, 16], sizes = [64, 256], strides = [1, 1]} : vector<64x290xbf16> to vector<64x256xbf16>
    %c0_i32_11 = arith.constant 0 : i32
    %43 = arith.sitofp %c0_i32_11 : i32 to bf16
    %44 = vector.broadcast %43 : bf16 to vector<64x256xbf16>
    %45 = arith.select %28, %42, %44 : vector<64x256xi1>, vector<64x256xbf16>
    %46 = vector.extract_strided_slice %7 {offsets = [0, 17], sizes = [64, 256], strides = [1, 1]} : vector<64x290xbf16> to vector<64x256xbf16>
    %47 = vector.extract_strided_slice %7 {offsets = [0, 18], sizes = [64, 256], strides = [1, 1]} : vector<64x290xbf16> to vector<64x256xbf16>
    %c0_i32_12 = arith.constant 0 : i32
    %48 = arith.sitofp %c0_i32_12 : i32 to bf16
    %49 = vector.broadcast %48 : bf16 to vector<64x256xbf16>
    %50 = arith.select %32, %47, %49 : vector<64x256xi1>, vector<64x256xbf16>
    %51 = vector.extract_strided_slice %7 {offsets = [0, 32], sizes = [64, 256], strides = [1, 1]} : vector<64x290xbf16> to vector<64x256xbf16>
    %c0_i32_13 = arith.constant 0 : i32
    %52 = arith.sitofp %c0_i32_13 : i32 to bf16
    %53 = vector.broadcast %52 : bf16 to vector<64x256xbf16>
    %54 = arith.select %28, %51, %53 : vector<64x256xi1>, vector<64x256xbf16>
    %55 = vector.extract_strided_slice %7 {offsets = [0, 33], sizes = [64, 256], strides = [1, 1]} : vector<64x290xbf16> to vector<64x256xbf16>
    %56 = vector.extract_strided_slice %7 {offsets = [0, 34], sizes = [64, 256], strides = [1, 1]} : vector<64x290xbf16> to vector<64x256xbf16>
    %c0_i32_14 = arith.constant 0 : i32
    %57 = arith.sitofp %c0_i32_14 : i32 to bf16
    %58 = vector.broadcast %57 : bf16 to vector<64x256xbf16>
    %59 = arith.select %32, %56, %58 : vector<64x256xi1>, vector<64x256xbf16>
    %60 = tpu.concatenate %36, %37, %41, %45, %46, %50, %54, %55, %59 in 0 : vector<64x256xbf16>, vector<64x256xbf16>, vector<64x256xbf16>, vector<64x256xbf16>, vector<64x256xbf16>, vector<64x256xbf16>, vector<64x256xbf16>, vector<64x256xbf16>, vector<64x256xbf16> -> vector<576x256xbf16>
    %c0_15 = arith.constant 0 : index
    %c0_16 = arith.constant 0 : index
    %61 = vector.load %arg2[%c0_15, %c0_16] : memref<4x576xbf16, #tpu.memory_space<vmem>>, vector<4x576xbf16>
    %cst_17 = arith.constant dense<0.000000e+00> : vector<4x256xf32>
    %62 = tpu.matmul %61, %60, %cst_17 {dimension_numbers = #tpu.dot_dimension_numbers<[1], [0], [0], [1], [0, 0, 1, 1], [], []>} : vector<4x576xbf16>, vector<576x256xbf16>, vector<4x256xf32> -> vector<4x256xf32>
    %c0_18 = arith.constant 0 : index
    %c0_19 = arith.constant 0 : index
    %63 = vector.load %arg3[%c0_18, %c0_19] : memref<4x1xf32, #tpu.memory_space<vmem>>, vector<4x1xf32>
    %64 = vector.broadcast %63 : vector<4x1xf32> to vector<4x256xf32>
    %65 = arith.addf %62, %64 : vector<4x256xf32>
    %cst_20 = arith.constant 0.000000e+00 : bf16
    %66 = vector.broadcast %cst_20 : bf16 to vector<256x9xbf16>
    %67 = tpu.concatenate %66, %5, %66 in 1 : vector<256x9xbf16>, vector<256x64xbf16>, vector<256x9xbf16> -> vector<256x82xbf16>
    %68 = tpu.iota {dimensions = array<i32: 1>} : vector<1x64xi32>
    %c8_i32 = arith.constant 8 : i32
    %c0_i32_21 = arith.constant 0 : i32
    %69 = arith.cmpi eq, %c8_i32, %c0_i32_21 : i32
    %c1_i32_22 = arith.constant 1 : i32
    %70 = arith.select %69, %c1_i32_22, %c8_i32 : i32
    %71 = vector.broadcast %70 : i32 to vector<1x64xi32>
    %72 = arith.remsi %68, %71 : vector<1x64xi32>
    %c0_i32_23 = arith.constant 0 : i32
    %73 = vector.broadcast %c0_i32_23 : i32 to vector<1x64xi32>
    %74 = arith.cmpi ne, %72, %73 : vector<1x64xi32>
    %c0_i32_24 = arith.constant 0 : i32
    %75 = vector.broadcast %c0_i32_24 : i32 to vector<1x64xi32>
    %76 = arith.cmpi slt, %72, %75 : vector<1x64xi32>
    %c0_i32_25 = arith.constant 0 : i32
    %77 = arith.cmpi slt, %70, %c0_i32_25 : i32
    %78 = vector.broadcast %77 : i1 to vector<1x64xi1>
    %79 = vector.broadcast %78 : vector<1x64xi1> to vector<1x64xi1>
    %80 = arith.xori %76, %79 : vector<1x64xi1>
    %81 = arith.andi %80, %74 : vector<1x64xi1>
    %82 = vector.broadcast %70 : i32 to vector<1x64xi32>
    %83 = arith.addi %72, %82 : vector<1x64xi32>
    %84 = arith.select %81, %83, %72 : vector<1x64xi1>, vector<1x64xi32>
    %c1_i32_26 = arith.constant 1 : i32
    %85 = vector.broadcast %c1_i32_26 : i32 to vector<1x64xi32>
    %86 = arith.cmpi sge, %84, %85 : vector<1x64xi32>
    %87 = vector.shape_cast %86 : vector<1x64xi1> to vector<1x64xi1>
    %88 = vector.broadcast %87 : vector<1x64xi1> to vector<256x64xi1>
    %c6_i32 = arith.constant 6 : i32
    %89 = vector.broadcast %c6_i32 : i32 to vector<1x64xi32>
    %90 = arith.cmpi sle, %84, %89 : vector<1x64xi32>
    %91 = vector.shape_cast %90 : vector<1x64xi1> to vector<1x64xi1>
    %92 = vector.broadcast %91 : vector<1x64xi1> to vector<256x64xi1>
    %93 = vector.extract_strided_slice %67 {offsets = [0, 0], sizes = [256, 64], strides = [1, 1]} : vector<256x82xbf16> to vector<256x64xbf16>
    %c0_i32_27 = arith.constant 0 : i32
    %94 = arith.sitofp %c0_i32_27 : i32 to bf16
    %95 = vector.broadcast %94 : bf16 to vector<256x64xbf16>
    %96 = arith.select %88, %93, %95 : vector<256x64xi1>, vector<256x64xbf16>
    %97 = vector.extract_strided_slice %67 {offsets = [0, 1], sizes = [256, 64], strides = [1, 1]} : vector<256x82xbf16> to vector<256x64xbf16>
    %98 = vector.extract_strided_slice %67 {offsets = [0, 2], sizes = [256, 64], strides = [1, 1]} : vector<256x82xbf16> to vector<256x64xbf16>
    %c0_i32_28 = arith.constant 0 : i32
    %99 = arith.sitofp %c0_i32_28 : i32 to bf16
    %100 = vector.broadcast %99 : bf16 to vector<256x64xbf16>
    %101 = arith.select %92, %98, %100 : vector<256x64xi1>, vector<256x64xbf16>
    %102 = vector.extract_strided_slice %67 {offsets = [0, 8], sizes = [256, 64], strides = [1, 1]} : vector<256x82xbf16> to vector<256x64xbf16>
    %c0_i32_29 = arith.constant 0 : i32
    %103 = arith.sitofp %c0_i32_29 : i32 to bf16
    %104 = vector.broadcast %103 : bf16 to vector<256x64xbf16>
    %105 = arith.select %88, %102, %104 : vector<256x64xi1>, vector<256x64xbf16>
    %106 = vector.extract_strided_slice %67 {offsets = [0, 9], sizes = [256, 64], strides = [1, 1]} : vector<256x82xbf16> to vector<256x64xbf16>
    %107 = vector.extract_strided_slice %67 {offsets = [0, 10], sizes = [256, 64], strides = [1, 1]} : vector<256x82xbf16> to vector<256x64xbf16>
    %c0_i32_30 = arith.constant 0 : i32
    %108 = arith.sitofp %c0_i32_30 : i32 to bf16
    %109 = vector.broadcast %108 : bf16 to vector<256x64xbf16>
    %110 = arith.select %92, %107, %109 : vector<256x64xi1>, vector<256x64xbf16>
    %111 = vector.extract_strided_slice %67 {offsets = [0, 16], sizes = [256, 64], strides = [1, 1]} : vector<256x82xbf16> to vector<256x64xbf16>
    %c0_i32_31 = arith.constant 0 : i32
    %112 = arith.sitofp %c0_i32_31 : i32 to bf16
    %113 = vector.broadcast %112 : bf16 to vector<256x64xbf16>
    %114 = arith.select %88, %111, %113 : vector<256x64xi1>, vector<256x64xbf16>
    %115 = vector.extract_strided_slice %67 {offsets = [0, 17], sizes = [256, 64], strides = [1, 1]} : vector<256x82xbf16> to vector<256x64xbf16>
    %116 = vector.extract_strided_slice %67 {offsets = [0, 18], sizes = [256, 64], strides = [1, 1]} : vector<256x82xbf16> to vector<256x64xbf16>
    %c0_i32_32 = arith.constant 0 : i32
    %117 = arith.sitofp %c0_i32_32 : i32 to bf16
    %118 = vector.broadcast %117 : bf16 to vector<256x64xbf16>
    %119 = arith.select %92, %116, %118 : vector<256x64xi1>, vector<256x64xbf16>
    %120 = tpu.concatenate %96, %97, %101, %105, %106, %110, %114, %115, %119 in 0 : vector<256x64xbf16>, vector<256x64xbf16>, vector<256x64xbf16>, vector<256x64xbf16>, vector<256x64xbf16>, vector<256x64xbf16>, vector<256x64xbf16>, vector<256x64xbf16>, vector<256x64xbf16> -> vector<2304x64xbf16>
    %c0_33 = arith.constant 0 : index
    %c0_34 = arith.constant 0 : index
    %121 = vector.load %arg4[%c0_33, %c0_34] : memref<16x2304xbf16, #tpu.memory_space<vmem>>, vector<16x2304xbf16>
    %cst_35 = arith.constant dense<0.000000e+00> : vector<16x64xf32>
    %122 = tpu.matmul %121, %120, %cst_35 {dimension_numbers = #tpu.dot_dimension_numbers<[1], [0], [0], [1], [0, 0, 1, 1], [], []>} : vector<16x2304xbf16>, vector<2304x64xbf16>, vector<16x64xf32> -> vector<16x64xf32>
    %c0_36 = arith.constant 0 : index
    %c0_37 = arith.constant 0 : index
    %123 = vector.load %arg5[%c0_36, %c0_37] : memref<16x1xf32, #tpu.memory_space<vmem>>, vector<16x1xf32>
    %124 = vector.broadcast %123 : vector<16x1xf32> to vector<16x64xf32>
    %125 = arith.addf %122, %124 : vector<16x64xf32>
    %126 = vector.extract_strided_slice %125 {offsets = [0, 0], sizes = [4, 64], strides = [1, 1]} : vector<16x64xf32> to vector<4x64xf32>
    %127 = arith.truncf %126 : vector<4x64xf32> to vector<4x64xbf16>
    %c0_38 = arith.constant 0 : index
    %c0_39 = arith.constant 0 : index
    %128 = vector.load %arg7[%c0_38, %c0_39] : memref<64x256xbf16, #tpu.memory_space<vmem>>, vector<64x256xbf16>
    %cst_40 = arith.constant dense<0.000000e+00> : vector<4x256xf32>
    %129 = tpu.matmul %127, %128, %cst_40 {dimension_numbers = #tpu.dot_dimension_numbers<[1], [0], [0], [1], [0, 0, 1, 1], [], []>} : vector<4x64xbf16>, vector<64x256xbf16>, vector<4x256xf32> -> vector<4x256xf32>
    %130 = arith.addf %129, %65 : vector<4x256xf32>
    %131 = vector.shape_cast %130 : vector<4x256xf32> to vector<1x4x256xf32>
    %c0_41 = arith.constant 0 : index
    %c0_42 = arith.constant 0 : index
    %c0_43 = arith.constant 0 : index
    %132 = vector.load %arg8[%c0_41, %c0_42, %c0_43] : memref<1x4x256xf32, #tpu.memory_space<vmem>>, vector<1x4x256xf32>
    tpu.vector_store %arg8[%c0_41, %c0_42, %c0_43], %131 {strides = array<i32>} : memref<1x4x256xf32, #tpu.memory_space<vmem>>, vector<1x4x256xf32>,
    %133 = vector.extract_strided_slice %125 {offsets = [4, 0], sizes = [12, 64], strides = [1, 1]} : vector<16x64xf32> to vector<12x64xf32>
    %134 = vector.shape_cast %133 : vector<12x64xf32> to vector<1x12x64xf32>
    %c0_44 = arith.constant 0 : index
    %c0_45 = arith.constant 0 : index
    %c0_46 = arith.constant 0 : index
    %135 = vector.load %arg9[%c0_44, %c0_45, %c0_46] : memref<1x12x64xf32, #tpu.memory_space<vmem>>, vector<1x12x64xf32>
    tpu.vector_store %arg9[%c0_44, %c0_45, %c0_46], %134 {strides = array<i32>} : memref<1x12x64xf32, #tpu.memory_space<vmem>>, vector<1x12x64xf32>,
    return
  }
  func.func @transform_0(%arg0: i32) -> (i32, i32, i32) {
    %c0_i32 = arith.constant 0 : i32
    %c0_i32_0 = arith.constant 0 : i32
    %c0_i32_1 = arith.constant 0 : i32
    return %arg0, %c0_i32, %c0_i32_0 : i32, i32, i32
  }
  func.func @transform_1(%arg0: i32) -> (i32, i32) {
    %c0_i32 = arith.constant 0 : i32
    %c0_i32_0 = arith.constant 0 : i32
    %c0_i32_1 = arith.constant 0 : i32
    return %c0_i32, %c0_i32_0 : i32, i32
  }
  func.func @transform_2(%arg0: i32) -> (i32, i32) {
    %c0_i32 = arith.constant 0 : i32
    %c0_i32_0 = arith.constant 0 : i32
    %c0_i32_1 = arith.constant 0 : i32
    return %c0_i32, %c0_i32_0 : i32, i32
  }
  func.func @transform_3(%arg0: i32) -> (i32, i32) {
    %c0_i32 = arith.constant 0 : i32
    %c0_i32_0 = arith.constant 0 : i32
    %c0_i32_1 = arith.constant 0 : i32
    return %c0_i32, %c0_i32_0 : i32, i32
  }
  func.func @transform_4(%arg0: i32) -> (i32, i32) {
    %c0_i32 = arith.constant 0 : i32
    %c0_i32_0 = arith.constant 0 : i32
    %c0_i32_1 = arith.constant 0 : i32
    return %c0_i32, %c0_i32_0 : i32, i32
  }
  func.func @transform_5(%arg0: i32) -> (i32, i32) {
    %c0_i32 = arith.constant 0 : i32
    %c0_i32_0 = arith.constant 0 : i32
    %c0_i32_1 = arith.constant 0 : i32
    return %c0_i32, %c0_i32_0 : i32, i32
  }
  func.func @transform_6(%arg0: i32) -> (i32, i32) {
    %c0_i32 = arith.constant 0 : i32
    %c0_i32_0 = arith.constant 0 : i32
    %c0_i32_1 = arith.constant 0 : i32
    return %c0_i32, %c0_i32_0 : i32, i32
  }
  func.func @transform_7(%arg0: i32) -> (i32, i32, i32) {
    %c0_i32 = arith.constant 0 : i32
    %c0_i32_0 = arith.constant 0 : i32
    %c0_i32_1 = arith.constant 0 : i32
    return %arg0, %c0_i32, %c0_i32_0 : i32, i32, i32
  }
  func.func @transform_8(%arg0: i32) -> (i32, i32, i32) {
    %c0_i32 = arith.constant 0 : i32
    %c0_i32_0 = arith.constant 0 : i32
    %c0_i32_1 = arith.constant 0 : i32
    return %arg0, %c0_i32, %c0_i32_0 : i32, i32, i32
  }
}

</mosaic_0001>

<llo_original>
// kernel: octave_conv2_forward.1
$region0: #{octave_conv2_forward.1}
  #allocation0 [shape = 'u32[]', space=smem, size = 0x4, offset = 0x4, fixed_abs, tag = 'smem constant byte address 0x4 - core index']
  #allocation1 [shape = 'u32[144,128]{1,0:T(1,128)}', space=vmem, size = 0x12000, scoped, tag = 'internal scratch']
  %s0 = inlined_call_operand.vmem [shape: bf16[2,256,256], index: 0, kind: input, shape index: {}]
  %s1 = inlined_call_operand.vmem [shape: bf16[4,576], index: 1, kind: input, shape index: {}]
  %s2 = inlined_call_operand.vmem [shape: f32[4,1], index: 2, kind: input, shape index: {}]
  %s3 = inlined_call_operand.vmem [shape: bf16[16,2304], index: 3, kind: input, shape index: {}]
  %s4 = inlined_call_operand.vmem [shape: f32[16,1], index: 4, kind: input, shape index: {}]
  %s5 = inlined_call_operand.vmem [shape: bf16[256,64], index: 5, kind: input, shape index: {}]
  %s6 = inlined_call_operand.vmem [shape: bf16[64,256], index: 6, kind: input, shape index: {}]
  %s7 = inlined_call_operand.vmem [shape: f32[2,4,256], index: 7, kind: output, shape index: {0}]
  %s8 = inlined_call_operand.vmem [shape: f32[2,12,64], index: 8, kind: output, shape index: {1}]
  %9 = xla_tuple %s7, %s8
  %s10 = sld [smem:[#allocation0]]
  $region69: #{octave_conv2_forward.1} parent=0
    _
  %s12 = ssub.s32 1, %s10
  %s13 = scalar_select 0, %s12, %s10
  loop: start=0, step=1, limit=4
  $region2: #{octave_conv2_forward.1} parent=0 // loop_pre_header
    _
  $region3: #{octave_conv2_forward.1} parent=0 // loop_header
    %s15 = sphi 0, %s19
    %p16 = scmp.ge.s32.totalorder %s15, 4
    %s25 = sphi 0, %s27
    %s28 = sphi 0, %s25
    %s29 = sphi 0, %s28
    %s45 = sphi 0, %s29
    %s49 = sphi 0, %s49
    %s51 = sphi 0, %s49
    %s52 = sphi 0, %s51
    %s66 = sphi 0, %s52
    %s70 = sphi 0, %s70
    %s72 = sphi 0, %s70
    %s73 = sphi 0, %s72
    %s87 = sphi 0, %s73
    %s91 = sphi 0, %s91
    %s93 = sphi 0, %s91
    %s94 = sphi 0, %s93
    %s108 = sphi 0, %s94
    %s112 = sphi 0, %s112
    %s114 = sphi 0, %s112
    %s115 = sphi 0, %s114
    %s129 = sphi 0, %s115
    %s133 = sphi 0, %s133
    %s135 = sphi 0, %s133
    %s136 = sphi 0, %s135
    %s150 = sphi 0, %s136
    %s154 = sphi 0, %s154
    %s156 = sphi 0, %s154
    %s157 = sphi 0, %s156
    %s171 = sphi 0, %s157
    %s177 = sphi 0, %s179
    %s180 = sphi 0, %s177
    %s181 = sphi 0, %s180
    %s197 = sphi 0, %s181
    %s203 = sphi 0, %s205
    %s206 = sphi 0, %s203
    %s207 = sphi 0, %s206
    %s223 = sphi 0, %s207
  $region4: #{octave_conv2_forward.1} parent=0 // loop_header_branch
    %18 = sbr.rel (%p16) target = $region8
  $region5: #{octave_conv2_forward.1} parent=0 // loop_body
    %s20 = ssub.s32 %s15, 1
    %s21 = ssub.s32 %s15, 2
    %s22 = sadd.s32 %s15, 1
    %s23 = ssub.s32 %s15, %s22
    %p24 = scmp.eq.s32.totalorder %s23, 0
    %s26 = sadd.s32 %s25, 1
    %s27 = scalar_select %p24, %s25, %s26
    %p30 = pneg %p24
    %p31 = scmp.eq.s32.totalorder %s15, 1
    %p32 = por %p30, %p31
    %p33 = scmp.ne.s32.totalorder %s25, %s28
    %p34 = scmp.eq.s32.totalorder %s15, 0
    %p35 = por %p33, %p34
    %p36 = scmp.ne.s32.totalorder %s25, %s28
    %p37 = scmp.eq.s32.totalorder %s20, 1
    %p38 = por %p36, %p37
    %p39 = scmp.ne.s32.totalorder %s28, %s29
    %p40 = scmp.eq.s32.totalorder %s20, 0
    %p41 = por %p39, %p40
    %p42 = scmp.ne.s32.totalorder %s28, %s29
    %p43 = scmp.eq.s32.totalorder %s21, 1
    %p44 = por %p42, %p43
    %p46 = scmp.ne.s32.totalorder %s29, %s45
    %p47 = scmp.eq.s32.totalorder %s21, 0
    %p48 = por %p46, %p47
    %s50 = sadd.s32 %s49, 1
    %p53 = scmp.eq.s32.totalorder %s15, 1
    %p54 = scmp.ne.s32.totalorder %s49, %s51
    %p55 = scmp.eq.s32.totalorder %s15, 0
    %p56 = por %p54, %p55
    %p57 = scmp.ne.s32.totalorder %s49, %s51
    %p58 = scmp.eq.s32.totalorder %s20, 1
    %p59 = por %p57, %p58
    %p60 = scmp.ne.s32.totalorder %s51, %s52
    %p61 = scmp.eq.s32.totalorder %s20, 0
    %p62 = por %p60, %p61
    %p63 = scmp.ne.s32.totalorder %s51, %s52
    %p64 = scmp.eq.s32.totalorder %s21, 1
    %p65 = por %p63, %p64
    %p67 = scmp.ne.s32.totalorder %s52, %s66
    %p68 = scmp.eq.s32.totalorder %s21, 0
    %p69 = por %p67, %p68
    %s71 = sadd.s32 %s70, 1
    %p74 = scmp.eq.s32.totalorder %s15, 1
    %p75 = scmp.ne.s32.totalorder %s70, %s72
    %p76 = scmp.eq.s32.totalorder %s15, 0
    %p77 = por %p75, %p76
    %p78 = scmp.ne.s32.totalorder %s70, %s72
    %p79 = scmp.eq.s32.totalorder %s20, 1
    %p80 = por %p78, %p79
    %p81 = scmp.ne.s32.totalorder %s72, %s73
    %p82 = scmp.eq.s32.totalorder %s20, 0
    %p83 = por %p81, %p82
    %p84 = scmp.ne.s32.totalorder %s72, %s73
    %p85 = scmp.eq.s32.totalorder %s21, 1
    %p86 = por %p84, %p85
    %p88 = scmp.ne.s32.totalorder %s73, %s87
    %p89 = scmp.eq.s32.totalorder %s21, 0
    %p90 = por %p88, %p89
    %s92 = sadd.s32 %s91, 1
    %p95 = scmp.eq.s32.totalorder %s15, 1
    %p96 = scmp.ne.s32.totalorder %s91, %s93
    %p97 = scmp.eq.s32.totalorder %s15, 0
    %p98 = por %p96, %p97
    %p99 = scmp.ne.s32.totalorder %s91, %s93
    %p100 = scmp.eq.s32.totalorder %s20, 1
    %p101 = por %p99, %p100
    %p102 = scmp.ne.s32.totalorder %s93, %s94
    %p103 = scmp.eq.s32.totalorder %s20, 0
    %p104 = por %p102, %p103
    %p105 = scmp.ne.s32.totalorder %s93, %s94
    %p106 = scmp.eq.s32.totalorder %s21, 1
    %p107 = por %p105, %p106
    %p109 = scmp.ne.s32.totalorder %s94, %s108
    %p110 = scmp.eq.s32.totalorder %s21, 0
    %p111 = por %p109, %p110
    %s113 = sadd.s32 %s112, 1
    %p116 = scmp.eq.s32.totalorder %s15, 1
    %p117 = scmp.ne.s32.totalorder %s112, %s114
    %p118 = scmp.eq.s32.totalorder %s15, 0
    %p119 = por %p117, %p118
    %p120 = scmp.ne.s32.totalorder %s112, %s114
    %p121 = scmp.eq.s32.totalorder %s20, 1
    %p122 = por %p120, %p121
    %p123 = scmp.ne.s32.totalorder %s114, %s115
    %p124 = scmp.eq.s32.totalorder %s20, 0
    %p125 = por %p123, %p124
    %p126 = scmp.ne.s32.totalorder %s114, %s115
    %p127 = scmp.eq.s32.totalorder %s21, 1
    %p128 = por %p126, %p127
    %p130 = scmp.ne.s32.totalorder %s115, %s129
    %p131 = scmp.eq.s32.totalorder %s21, 0
    %p132 = por %p130, %p131
    %s134 = sadd.s32 %s133, 1
    %p137 = scmp.eq.s32.totalorder %s15, 1
    %p138 = scmp.ne.s32.totalorder %s133, %s135
    %p139 = scmp.eq.s32.totalorder %s15, 0
    %p140 = por %p138, %p139
    %p141 = scmp.ne.s32.totalorder %s133, %s135
    %p142 = scmp.eq.s32.totalorder %s20, 1
    %p143 = por %p141, %p142
    %p144 = scmp.ne.s32.totalorder %s135, %s136
    %p145 = scmp.eq.s32.totalorder %s20, 0
    %p146 = por %p144, %p145
    %p147 = scmp.ne.s32.totalorder %s135, %s136
    %p148 = scmp.eq.s32.totalorder %s21, 1
    %p149 = por %p147, %p148
    %p151 = scmp.ne.s32.totalorder %s136, %s150
    %p152 = scmp.eq.s32.totalorder %s21, 0
    %p153 = por %p151, %p152
    %s155 = sadd.s32 %s154, 1
    %p158 = scmp.eq.s32.totalorder %s15, 1
    %p159 = scmp.ne.s32.totalorder %s154, %s156
    %p160 = scmp.eq.s32.totalorder %s15, 0
    %p161 = por %p159, %p160
    %p162 = scmp.ne.s32.totalorder %s154, %s156
    %p163 = scmp.eq.s32.totalorder %s20, 1
    %p164 = por %p162, %p163
    %p165 = scmp.ne.s32.totalorder %s156, %s157
    %p166 = scmp.eq.s32.totalorder %s20, 0
    %p167 = por %p165, %p166
    %p168 = scmp.ne.s32.totalorder %s156, %s157
    %p169 = scmp.eq.s32.totalorder %s21, 1
    %p170 = por %p168, %p169
    %p172 = scmp.ne.s32.totalorder %s157, %s171
    %p173 = scmp.eq.s32.totalorder %s21, 0
    %p174 = por %p172, %p173
    %s175 = ssub.s32 %s15, %s22
    %p176 = scmp.eq.s32.totalorder %s175, 0
    %s178 = sadd.s32 %s177, 1
    %s179 = scalar_select %p176, %s177, %s178
    %p182 = pneg %p176
    %p183 = scmp.eq.s32.totalorder %s15, 1
    %p184 = por %p182, %p183
    %p185 = scmp.ne.s32.totalorder %s177, %s180
    %p186 = scmp.eq.s32.totalorder %s15, 0
    %p187 = por %p185, %p186
    %p188 = scmp.ne.s32.totalorder %s177, %s180
    %p189 = scmp.eq.s32.totalorder %s20, 1
    %p190 = por %p188, %p189
    %p191 = scmp.ne.s32.totalorder %s180, %s181
    %p192 = scmp.eq.s32.totalorder %s20, 0
    %p193 = por %p191, %p192
    %p194 = scmp.ne.s32.totalorder %s180, %s181
    %p195 = scmp.eq.s32.totalorder %s21, 1
    %p196 = por %p194, %p195
    %p198 = scmp.ne.s32.totalorder %s181, %s197
    %p199 = scmp.eq.s32.totalorder %s21, 0
    %p200 = por %p198, %p199
    %s201 = ssub.s32 %s15, %s22
    %p202 = scmp.eq.s32.totalorder %s201, 0
    %s204 = sadd.s32 %s203, 1
    %s205 = scalar_select %p202, %s203, %s204
    %p208 = pneg %p202
    %p209 = scmp.eq.s32.totalorder %s15, 1
    %p210 = por %p208, %p209
    %p211 = scmp.ne.s32.totalorder %s203, %s206
    %p212 = scmp.eq.s32.totalorder %s15, 0
    %p213 = por %p211, %p212
    %p214 = scmp.ne.s32.totalorder %s203, %s206
    %p215 = scmp.eq.s32.totalorder %s20, 1
    %p216 = por %p214, %p215
    %p217 = scmp.ne.s32.totalorder %s206, %s207
    %p218 = scmp.eq.s32.totalorder %s20, 0
    %p219 = por %p217, %p218
    %p220 = scmp.ne.s32.totalorder %s206, %s207
    %p221 = scmp.eq.s32.totalorder %s21, 1
    %p222 = por %p220, %p221
    %p224 = scmp.ne.s32.totalorder %s207, %s223
    %p225 = scmp.eq.s32.totalorder %s21, 0
    %p226 = por %p224, %p225
    %p227 = scmp.le.s32.totalorder 1, %s15
    %p228 = scmp.lt.s32.totalorder %s15, 3
    %p229 = pnand %p227, %p228
    %p230 = pneg %p229
    // Predicated region
    $region9: #{octave_conv2_forward.1} parent=5 // pred_check
      _
    $region10: #{octave_conv2_forward.1} parent=5 // pred_check_branch
      %232 = sbr.rel (%p229) target = $region12
    $region11: #{octave_conv2_forward.1} parent=5 // pred_region
      %s233 = ssub.s32 %s15, 1
      // Predicated region
      $region13: #{octave_conv2_forward.1} parent=11 // pred_check
        %p234 = pneg %p62
      $region14: #{octave_conv2_forward.1} parent=11 // pred_check_branch
        %236 = sbr.rel (%p234) target = $region16
      $region15: #{octave_conv2_forward.1} parent=11 // pred_region
        _
      $region16: #{octave_conv2_forward.1} parent=11 // pred_fallthru
        _
      // Predicated region
      $region17: #{octave_conv2_forward.1} parent=11 // pred_check
        %p237 = pneg %p83
      $region18: #{octave_conv2_forward.1} parent=11 // pred_check_branch
        %239 = sbr.rel (%p237) target = $region20
      $region19: #{octave_conv2_forward.1} parent=11 // pred_region
        _
      $region20: #{octave_conv2_forward.1} parent=11 // pred_fallthru
        _
      // Predicated region
      $region21: #{octave_conv2_forward.1} parent=11 // pred_check
        %p240 = pneg %p104
      $region22: #{octave_conv2_forward.1} parent=11 // pred_check_branch
        %242 = sbr.rel (%p240) target = $region24
      $region23: #{octave_conv2_forward.1} parent=11 // pred_region
        _
      $region24: #{octave_conv2_forward.1} parent=11 // pred_fallthru
        _
      // Predicated region
      $region25: #{octave_conv2_forward.1} parent=11 // pred_check
        %p243 = pneg %p125
      $region26: #{octave_conv2_forward.1} parent=11 // pred_check_branch
        %245 = sbr.rel (%p243) target = $region28
      $region27: #{octave_conv2_forward.1} parent=11 // pred_region
        _
      $region28: #{octave_conv2_forward.1} parent=11 // pred_fallthru
        _
      // Predicated region
      $region29: #{octave_conv2_forward.1} parent=11 // pred_check
        %p246 = pneg %p146
      $region30: #{octave_conv2_forward.1} parent=11 // pred_check_branch
        %248 = sbr.rel (%p246) target = $region32
      $region31: #{octave_conv2_forward.1} parent=11 // pred_region
        _
      $region32: #{octave_conv2_forward.1} parent=11 // pred_fallthru
        _
      // Predicated region
      $region33: #{octave_conv2_forward.1} parent=11 // pred_check
        %p249 = pneg %p167
      $region34: #{octave_conv2_forward.1} parent=11 // pred_check_branch
        %251 = sbr.rel (%p249) target = $region36
      $region35: #{octave_conv2_forward.1} parent=11 // pred_region
        _
      $region36: #{octave_conv2_forward.1} parent=11 // pred_fallthru
        _
    $region12: #{octave_conv2_forward.1} parent=5 // pred_fallthru
      _
    %p252 = scmp.lt.s32.totalorder %s15, 2
    // Predicated region
    $region37: #{octave_conv2_forward.1} parent=5 // pred_check
      %p253 = pneg %p252
    $region38: #{octave_conv2_forward.1} parent=5 // pred_check_branch
      %255 = sbr.rel (%p253) target = $region40
    $region39: #{octave_conv2_forward.1} parent=5 // pred_region
      // Predicated region
      $region41: #{octave_conv2_forward.1} parent=39 // pred_check
        %p256 = pneg %p35
      $region42: #{octave_conv2_forward.1} parent=39 // pred_check_branch
        %258 = sbr.rel (%p256) target = $region44
      $region43: #{octave_conv2_forward.1} parent=39 // pred_region
        %p259 = scmp.lt.s32.totalorder %s15, 1
        %s260 = scalar_select %p259, %s15, 1
        %s261 = smul.addr %s260, 64
        %s262 = smul.addr %s261, 4
        %s263 = scalar_lea.vmem %s0, %s262
      $region44: #{octave_conv2_forward.1} parent=39 // pred_fallthru
        _
    $region40: #{octave_conv2_forward.1} parent=5 // pred_fallthru
      _
    %p264 = scmp.le.s32.totalorder 1, %s15
    %p265 = scmp.lt.s32.totalorder %s15, 3
    %p266 = pnand %p264, %p265
    %p267 = pneg %p266
    // Predicated region
    $region45: #{octave_conv2_forward.1} parent=5 // pred_check
      _
    $region46: #{octave_conv2_forward.1} parent=5 // pred_check_branch
      %269 = sbr.rel (%p266) target = $region48
    $region47: #{octave_conv2_forward.1} parent=5 // pred_region
      %s270 = ssub.s32 %s15, 1
      %p271 = scmp.lt.s32.totalorder %s20, 1
      %s272 = scalar_select %p271, %s20, 1
      %s273 = smul.addr %s272, 64
      %s274 = smul.addr %s273, 4
      %s275 = scalar_lea.vmem %s0, %s274
      %p276 = pneg %p41
      %p277 = pneg %p38
      %p278 = pneg %p62
      %p279 = pneg %p59
      %p280 = pneg %p83
      %p281 = pneg %p80
      %p282 = pneg %p104
      %p283 = pneg %p101
      %p284 = pneg %p125
      %p285 = pneg %p122
      %p286 = pneg %p146
      %p287 = pneg %p143
      %p288 = pneg %p167
      %p289 = pneg %p164
      %p290 = pneg %p193
      %p291 = pneg %p190
      %p292 = scmp.lt.s32.totalorder %s20, 1
      %s293 = scalar_select %p292, %s20, 1
      %s294 = smul.addr %s293, 2
      %s295 = smul.addr %s294, 4
      %s296 = scalar_lea.vmem %s7, %s295
      %p297 = pneg %p219
      %p298 = pneg %p216
      %p299 = scmp.lt.s32.totalorder %s20, 1
      %s300 = scalar_select %p299, %s20, 1
      %s301 = smul.addr %s300, 2
      %s302 = smul.addr %s301, 8
      %s303 = scalar_lea.vmem %s8, %s302
      %p304 = scmp.lt.s32.totalorder %s20, 1
      %s305 = scalar_select %p304, %s20, 1
      %s306 = smul.addr %s305, 64
      %s307 = smul.addr %s306, 4
      %s308 = scalar_lea.vmem %s0, %s307
      %p309 = scmp.lt.s32.totalorder %s20, 1
      %s310 = scalar_select %p309, %s20, 1
      %s311 = smul.addr %s310, 2
      %s312 = smul.addr %s311, 4
      %s313 = scalar_lea.vmem %s7, %s312
      %p314 = scmp.lt.s32.totalorder %s20, 1
      %s315 = scalar_select %p314, %s20, 1
      %s316 = smul.addr %s315, 2
      %s317 = smul.addr %s316, 8
      %s318 = scalar_lea.vmem %s8, %s317
      %v322 = vld [vmem:[%s308] sm:$0xff]
      %v323 = vld [vmem:[%s308 + $0x8] sm:$0xff]
      %v324 = vld [vmem:[%s308 + $0x10] sm:$0xff]
      %v325 = vld [vmem:[%s308 + $0x18] sm:$0xff]
      %v326 = vld [vmem:[%s308 + $0x20] sm:$0xff]
      %v327 = vld [vmem:[%s308 + $0x28] sm:$0xff]
      %v328 = vld [vmem:[%s308 + $0x30] sm:$0xff]
      %v329 = vld [vmem:[%s308 + $0x38] sm:$0xff]
      %v330 = vld [vmem:[%s308 + $0x40] sm:$0xff]
      %v331 = vld [vmem:[%s308 + $0x48] sm:$0xff]
      %v332 = vld [vmem:[%s308 + $0x50] sm:$0xff]
      %v333 = vld [vmem:[%s308 + $0x58] sm:$0xff]
      %v334 = vld [vmem:[%s308 + $0x60] sm:$0xff]
      %v335 = vld [vmem:[%s308 + $0x68] sm:$0xff]
      %v336 = vld [vmem:[%s308 + $0x70] sm:$0xff]
      %v337 = vld [vmem:[%s308 + $0x78] sm:$0xff]
      %v338 = vld [vmem:[%s308 + $0x80] sm:$0xff]
      %v339 = vld [vmem:[%s308 + $0x88] sm:$0xff]
      %v340 = vld [vmem:[%s308 + $0x90] sm:$0xff]
      %v341 = vld [vmem:[%s308 + $0x98] sm:$0xff]
      %v342 = vld [vmem:[%s308 + $0xa0] sm:$0xff]
      %v343 = vld [vmem:[%s308 + $0xa8] sm:$0xff]
      %v344 = vld [vmem:[%s308 + $0xb0] sm:$0xff]
      %v345 = vld [vmem:[%s308 + $0xb8] sm:$0xff]
      %v346 = vld [vmem:[%s308 + $0xc0] sm:$0xff]
      %v347 = vld [vmem:[%s308 + $0xc8] sm:$0xff]
      %v348 = vld [vmem:[%s308 + $0xd0] sm:$0xff]
      %v349 = vld [vmem:[%s308 + $0xd8] sm:$0xff]
      %v350 = vld [vmem:[%s308 + $0xe0] sm:$0xff]
      %v351 = vld [vmem:[%s308 + $0xe8] sm:$0xff]
      %v352 = vld [vmem:[%s308 + $0xf0] sm:$0xff]
      %v353 = vld [vmem:[%s308 + $0xf8] sm:$0xff]
      %v354 = vld [vmem:[%s5] sm:$0xf]
      %v355 = vld [vmem:[%s5 + $0x4] sm:$0xf]
      %v356 = vld [vmem:[%s5 + $0x8] sm:$0xf]
      %v357 = vld [vmem:[%s5 + $0xc] sm:$0xf]
      %v358 = vld [vmem:[%s5 + $0x10] sm:$0xf]
      %v359 = vld [vmem:[%s5 + $0x14] sm:$0xf]
      %v360 = vld [vmem:[%s5 + $0x18] sm:$0xf]
      %v361 = vld [vmem:[%s5 + $0x1c] sm:$0xf]
      %v362 = vld [vmem:[%s5 + $0x20] sm:$0xf]
      %v363 = vld [vmem:[%s5 + $0x24] sm:$0xf]
      %v364 = vld [vmem:[%s5 + $0x28] sm:$0xf]
      %v365 = vld [vmem:[%s5 + $0x2c] sm:$0xf]
      %v366 = vld [vmem:[%s5 + $0x30] sm:$0xf]
      %v367 = vld [vmem:[%s5 + $0x34] sm:$0xf]
      %v368 = vld [vmem:[%s5 + $0x38] sm:$0xf]
      %v369 = vld [vmem:[%s5 + $0x3c] sm:$0xf]
      %v370 = vld [vmem:[%s5 + $0x40] sm:$0xf]
      %v371 = vld [vmem:[%s5 + $0x44] sm:$0xf]
      %v372 = vld [vmem:[%s5 + $0x48] sm:$0xf]
      %v373 = vld [vmem:[%s5 + $0x4c] sm:$0xf]
      %v374 = vld [vmem:[%s5 + $0x50] sm:$0xf]
      %v375 = vld [vmem:[%s5 + $0x54] sm:$0xf]
      %v376 = vld [vmem:[%s5 + $0x58] sm:$0xf]
      %v377 = vld [vmem:[%s5 + $0x5c] sm:$0xf]
      %v378 = vld [vmem:[%s5 + $0x60] sm:$0xf]
      %v379 = vld [vmem:[%s5 + $0x64] sm:$0xf]
      %v380 = vld [vmem:[%s5 + $0x68] sm:$0xf]
      %v381 = vld [vmem:[%s5 + $0x6c] sm:$0xf]
      %v382 = vld [vmem:[%s5 + $0x70] sm:$0xf]
      %v383 = vld [vmem:[%s5 + $0x74] sm:$0xf]
      %v384 = vld [vmem:[%s5 + $0x78] sm:$0xf]
      %v385 = vld [vmem:[%s5 + $0x7c] sm:$0xf]
      %v418 = vunpack.c.l.b16 %v322
      %v419 = vunpack.c.h.b16 %v322
      %v420 = vunpack.c.l.b16 %v323
      %v421 = vunpack.c.h.b16 %v323
      %v422 = vunpack.c.l.b16 %v324
      %v423 = vunpack.c.h.b16 %v324
      %v424 = vunpack.c.l.b16 %v325
      %v425 = vunpack.c.h.b16 %v325
      %v426 = vunpack.c.l.b16 %v326
      %v427 = vunpack.c.h.b16 %v326
      %v428 = vunpack.c.l.b16 %v327
      %v429 = vunpack.c.h.b16 %v327
      %v430 = vunpack.c.l.b16 %v328
      %v431 = vunpack.c.h.b16 %v328
      %v432 = vunpack.c.l.b16 %v329
      %v433 = vunpack.c.h.b16 %v329
      %v434 = vunpack.c.l.b16 %v330
      %v435 = vunpack.c.h.b16 %v330
      %v436 = vunpack.c.l.b16 %v331
      %v437 = vunpack.c.h.b16 %v331
      %v438 = vunpack.c.l.b16 %v332
      %v439 = vunpack.c.h.b16 %v332
      %v440 = vunpack.c.l.b16 %v333
      %v441 = vunpack.c.h.b16 %v333
      %v442 = vunpack.c.l.b16 %v334
      %v443 = vunpack.c.h.b16 %v334
      %v444 = vunpack.c.l.b16 %v335
      %v445 = vunpack.c.h.b16 %v335
      %v446 = vunpack.c.l.b16 %v336
      %v447 = vunpack.c.h.b16 %v336
      %v448 = vunpack.c.l.b16 %v337
      %v449 = vunpack.c.h.b16 %v337
      %v450 = vunpack.c.l.b16 %v338
      %v451 = vunpack.c.h.b16 %v338
      %v452 = vunpack.c.l.b16 %v339
      %v453 = vunpack.c.h.b16 %v339
      %v454 = vunpack.c.l.b16 %v340
      %v455 = vunpack.c.h.b16 %v340
      %v456 = vunpack.c.l.b16 %v341
      %v457 = vunpack.c.h.b16 %v341
      %v458 = vunpack.c.l.b16 %v342
      %v459 = vunpack.c.h.b16 %v342
      %v460 = vunpack.c.l.b16 %v343
      %v461 = vunpack.c.h.b16 %v343
      %v462 = vunpack.c.l.b16 %v344
      %v463 = vunpack.c.h.b16 %v344
      %v464 = vunpack.c.l.b16 %v345
      %v465 = vunpack.c.h.b16 %v345
      %v466 = vunpack.c.l.b16 %v346
      %v467 = vunpack.c.h.b16 %v346
      %v468 = vunpack.c.l.b16 %v347
      %v469 = vunpack.c.h.b16 %v347
      %v470 = vunpack.c.l.b16 %v348
      %v471 = vunpack.c.h.b16 %v348
      %v472 = vunpack.c.l.b16 %v349
      %v473 = vunpack.c.h.b16 %v349
      %v474 = vunpack.c.l.b16 %v350
      %v475 = vunpack.c.h.b16 %v350
      %v476 = vunpack.c.l.b16 %v351
      %v477 = vunpack.c.h.b16 %v351
      %v478 = vunpack.c.l.b16 %v352
      %v479 = vunpack.c.h.b16 %v352
      %v480 = vunpack.c.l.b16 %v353
      %v481 = vunpack.c.h.b16 %v353
      %v482 = vpack.c.b16 %v420, %v418
      %v483 = vpack.c.b16 %v421, %v419
      %v484 = vpack.c.b16 %v424, %v422
      %v485 = vpack.c.b16 %v425, %v423
      %v486 = vpack.c.b16 %v428, %v426
      %v487 = vpack.c.b16 %v429, %v427
      %v488 = vpack.c.b16 %v432, %v430
      %v489 = vpack.c.b16 %v433, %v431
      %v490 = vpack.c.b16 %v436, %v434
      %v491 = vpack.c.b16 %v437, %v435
      %v492 = vpack.c.b16 %v440, %v438
      %v493 = vpack.c.b16 %v441, %v439
      %v494 = vpack.c.b16 %v444, %v442
      %v495 = vpack.c.b16 %v445, %v443
      %v496 = vpack.c.b16 %v448, %v446
      %v497 = vpack.c.b16 %v449, %v447
      %v498 = vpack.c.b16 %v452, %v450
      %v499 = vpack.c.b16 %v453, %v451
      %v500 = vpack.c.b16 %v456, %v454
      %v501 = vpack.c.b16 %v457, %v455
      %v502 = vpack.c.b16 %v460, %v458
      %v503 = vpack.c.b16 %v461, %v459
      %v504 = vpack.c.b16 %v464, %v462
      %v505 = vpack.c.b16 %v465, %v463
      %v506 = vpack.c.b16 %v468, %v466
      %v507 = vpack.c.b16 %v469, %v467
      %v508 = vpack.c.b16 %v472, %v470
      %v509 = vpack.c.b16 %v473, %v471
      %v510 = vpack.c.b16 %v476, %v474
      %v511 = vpack.c.b16 %v477, %v475
      %v512 = vpack.c.b16 %v480, %v478
      %v513 = vpack.c.b16 %v481, %v479
      %v578 = vunpack.c.l.b16 %v354
      %v579 = vunpack.c.l.b16 %v355
      %v580 = vunpack.c.l.b16 %v356
      %v581 = vunpack.c.l.b16 %v357
      %v582 = vunpack.c.l.b16 %v358
      %v583 = vunpack.c.l.b16 %v359
      %v584 = vunpack.c.l.b16 %v360
      %v585 = vunpack.c.l.b16 %v361
      %v586 = vunpack.c.l.b16 %v362
      %v587 = vunpack.c.l.b16 %v363
      %v588 = vunpack.c.l.b16 %v364
      %v589 = vunpack.c.l.b16 %v365
      %v590 = vunpack.c.l.b16 %v366
      %v591 = vunpack.c.l.b16 %v367
      %v592 = vunpack.c.l.b16 %v368
      %v593 = vunpack.c.l.b16 %v369
      %v594 = vunpack.c.l.b16 %v370
      %v595 = vunpack.c.l.b16 %v371
      %v596 = vunpack.c.l.b16 %v372
      %v597 = vunpack.c.l.b16 %v373
      %v598 = vunpack.c.l.b16 %v374
      %v599 = vunpack.c.l.b16 %v375
      %v600 = vunpack.c.l.b16 %v376
      %v601 = vunpack.c.l.b16 %v377
      %v602 = vunpack.c.l.b16 %v378
      %v603 = vunpack.c.l.b16 %v379
      %v604 = vunpack.c.l.b16 %v380
      %v605 = vunpack.c.l.b16 %v381
      %v606 = vunpack.c.l.b16 %v382
      %v607 = vunpack.c.l.b16 %v383
      %v608 = vunpack.c.l.b16 %v384
      %v609 = vunpack.c.l.b16 %v385
      %v610 = vpack.c.b16 %v579, %v578
      %v611 = vpack.c.b16 %v581, %v580
      %v612 = vpack.c.b16 %v583, %v582
      %v613 = vpack.c.b16 %v585, %v584
      %v614 = vpack.c.b16 %v587, %v586
      %v615 = vpack.c.b16 %v589, %v588
      %v616 = vpack.c.b16 %v591, %v590
      %v617 = vpack.c.b16 %v593, %v592
      %v618 = vpack.c.b16 %v595, %v594
      %v619 = vpack.c.b16 %v597, %v596
      %v620 = vpack.c.b16 %v599, %v598
      %v621 = vpack.c.b16 %v601, %v600
      %v622 = vpack.c.b16 %v603, %v602
      %v623 = vpack.c.b16 %v605, %v604
      %v624 = vpack.c.b16 %v607, %v606
      %v625 = vpack.c.b16 %v609, %v608
      %642 = vmatprep.subr.bf16.mxu0 0
      %643 = vmatpush1.bf16.msra.mxu0 %v610
      %644 = vmatprep.subr.bf16.mxu0 0
      %645 = vmatpush1.bf16.msra.mxu0 %v611
      %646 = vmatprep.subr.bf16.mxu0 0
      %647 = vmatpush1.bf16.msra.mxu0 %v612
      %648 = vmatprep.subr.bf16.mxu0 0
      %649 = vmatpush1.bf16.msra.mxu0 %v613
      %650 = vmatprep.subr.bf16.mxu0 0
      %651 = vmatpush1.bf16.msra.mxu0 %v614
      %652 = vmatprep.subr.bf16.mxu0 0
      %653 = vmatpush1.bf16.msra.mxu0 %v615
      %654 = vmatprep.subr.bf16.mxu0 0
      %655 = vmatpush1.bf16.msra.mxu0 %v616
      %656 = vmatprep.subr.bf16.mxu0 0
      %657 = vmatpush1.bf16.msra.mxu0 %v617
      %658 = vmatprep.subr.bf16.mxu0 0
      %659 = vmatpush1.bf16.msra.mxu0 %v618
      %660 = vmatprep.subr.bf16.mxu0 0
      %661 = vmatpush1.bf16.msra.mxu0 %v619
      %662 = vmatprep.subr.bf16.mxu0 0
      %663 = vmatpush1.bf16.msra.mxu0 %v620
      %664 = vmatprep.subr.bf16.mxu0 0
      %665 = vmatpush1.bf16.msra.mxu0 %v621
      %666 = vmatprep.subr.bf16.mxu0 0
      %667 = vmatpush1.bf16.msra.mxu0 %v622
      %668 = vmatprep.subr.bf16.mxu0 0
      %669 = vmatpush1.bf16.msra.mxu0 %v623
      %670 = vmatprep.subr.bf16.mxu0 0
      %671 = vmatpush1.bf16.msra.mxu0 %v624
      %672 = vmatprep.subr.bf16.mxu0 0
      %673 = vmatpush1.bf16.msra.mxu0 %v625
      %674 = vmatprep.mubr.bf16.mxu0 %v483
      %675 = vmatmul.mubr.bf16.gmra.mrb[0].mxu0 %v482
      %v676 = vpop.f32.mrb[0].mxu0
      %v677 = vadd.f32 0.0, %v676
      %v678 = vpop.f32.mrb[0].mxu0
      %v679 = vpop.f32.mrb[0].mxu0
      %v680 = vadd.f32 0.0, %v679
      %v681 = vpop.f32.mrb[0].mxu0
      %682 = vmatprep.mubr.bf16.mxu0 %v485
      %683 = vmatmul.mubr.bf16.gmra.mrb[0].mxu0 %v484
      %v684 = vpop.f32.mrb[0].mxu0
      %v685 = vadd.f32 0.0, %v684
      %v686 = vpop.f32.mrb[0].mxu0
      %v687 = vpop.f32.mrb[0].mxu0
      %v688 = vadd.f32 0.0, %v687
      %v689 = vpop.f32.mrb[0].mxu0
      %690 = vmatprep.mubr.bf16.mxu0 %v487
      %691 = vmatmul.mubr.bf16.gmra.mrb[0].mxu0 %v486
      %v692 = vpop.f32.mrb[0].mxu0
      %v693 = vadd.f32 0.0, %v692
      %v694 = vpop.f32.mrb[0].mxu0
      %v695 = vpop.f32.mrb[0].mxu0
      %v696 = vadd.f32 0.0, %v695
      %v697 = vpop.f32.mrb[0].mxu0
      %698 = vmatprep.mubr.bf16.mxu0 %v489
      %699 = vmatmul.mubr.bf16.gmra.mrb[0].mxu0 %v488
      %v700 = vpop.f32.mrb[0].mxu0
      %v701 = vadd.f32 0.0, %v700
      %v702 = vpop.f32.mrb[0].mxu0
      %v703 = vpop.f32.mrb[0].mxu0
      %v704 = vadd.f32 0.0, %v703
      %v705 = vpop.f32.mrb[0].mxu0
      %706 = vmatprep.mubr.bf16.mxu0 %v491
      %707 = vmatmul.mubr.bf16.gmra.mrb[0].mxu0 %v490
      %v708 = vpop.f32.mrb[0].mxu0
      %v709 = vadd.f32 0.0, %v708
      %v710 = vpop.f32.mrb[0].mxu0
      %v711 = vpop.f32.mrb[0].mxu0
      %v712 = vadd.f32 0.0, %v711
      %v713 = vpop.f32.mrb[0].mxu0
      %714 = vmatprep.mubr.bf16.mxu0 %v493
      %715 = vmatmul.mubr.bf16.gmra.mrb[0].mxu0 %v492
      %v716 = vpop.f32.mrb[0].mxu0
      %v717 = vadd.f32 0.0, %v716
      %v718 = vpop.f32.mrb[0].mxu0
      %v719 = vpop.f32.mrb[0].mxu0
      %v720 = vadd.f32 0.0, %v719
      %v721 = vpop.f32.mrb[0].mxu0
      %722 = vmatprep.mubr.bf16.mxu0 %v495
      %723 = vmatmul.mubr.bf16.gmra.mrb[0].mxu0 %v494
      %v724 = vpop.f32.mrb[0].mxu0
      %v725 = vadd.f32 0.0, %v724
      %v726 = vpop.f32.mrb[0].mxu0
      %v727 = vpop.f32.mrb[0].mxu0
      %v728 = vadd.f32 0.0, %v727
      %v729 = vpop.f32.mrb[0].mxu0
      %730 = vmatprep.mubr.bf16.mxu0 %v497
      %731 = vmatmul.mubr.bf16.gmra.mrb[0].mxu0 %v496
      %v732 = vpop.f32.mrb[0].mxu0
      %v733 = vadd.f32 0.0, %v732
      %v734 = vpop.f32.mrb[0].mxu0
      %v735 = vpop.f32.mrb[0].mxu0
      %v736 = vadd.f32 0.0, %v735
      %v737 = vpop.f32.mrb[0].mxu0
      %738 = vmatprep.mubr.bf16.mxu0 %v499
      %739 = vmatmul.mubr.bf16.gmra.mrb[0].mxu0 %v498
      %v740 = vpop.f32.mrb[0].mxu0
      %v741 = vadd.f32 0.0, %v740
      %v742 = vpop.f32.mrb[0].mxu0
      %v743 = vpop.f32.mrb[0].mxu0
      %v744 = vadd.f32 0.0, %v743
      %v745 = vpop.f32.mrb[0].mxu0
      %746 = vmatprep.mubr.bf16.mxu0 %v501
      %747 = vmatmul.mubr.bf16.gmra.mrb[0].mxu0 %v500
      %v748 = vpop.f32.mrb[0].mxu0
      %v749 = vadd.f32 0.0, %v748
      %v750 = vpop.f32.mrb[0].mxu0
      %v751 = vpop.f32.mrb[0].mxu0
      %v752 = vadd.f32 0.0, %v751
      %v753 = vpop.f32.mrb[0].mxu0
      %754 = vmatprep.mubr.bf16.mxu0 %v503
      %755 = vmatmul.mubr.bf16.gmra.mrb[0].mxu0 %v502
      %v756 = vpop.f32.mrb[0].mxu0
      %v757 = vadd.f32 0.0, %v756
      %v758 = vpop.f32.mrb[0].mxu0
      %v759 = vpop.f32.mrb[0].mxu0
      %v760 = vadd.f32 0.0, %v759
      %v761 = vpop.f32.mrb[0].mxu0
      %762 = vmatprep.mubr.bf16.mxu0 %v505
      %763 = vmatmul.mubr.bf16.gmra.mrb[0].mxu0 %v504
      %v764 = vpop.f32.mrb[0].mxu0
      %v765 = vadd.f32 0.0, %v764
      %v766 = vpop.f32.mrb[0].mxu0
      %v767 = vpop.f32.mrb[0].mxu0
      %v768 = vadd.f32 0.0, %v767
      %v769 = vpop.f32.mrb[0].mxu0
      %770 = vmatprep.mubr.bf16.mxu0 %v507
      %771 = vmatmul.mubr.bf16.gmra.mrb[0].mxu0 %v506
      %v772 = vpop.f32.mrb[0].mxu0
      %v773 = vadd.f32 0.0, %v772
      %v774 = vpop.f32.mrb[0].mxu0
      %v775 = vpop.f32.mrb[0].mxu0
      %v776 = vadd.f32 0.0, %v775
      %v777 = vpop.f32.mrb[0].mxu0
      %778 = vmatprep.mubr.bf16.mxu0 %v509
      %779 = vmatmul.mubr.bf16.gmra.mrb[0].mxu0 %v508
      %v780 = vpop.f32.mrb[0].mxu0
      %v781 = vadd.f32 0.0, %v780
      %v782 = vpop.f32.mrb[0].mxu0
      %v783 = vpop.f32.mrb[0].mxu0
      %v784 = vadd.f32 0.0, %v783
      %v785 = vpop.f32.mrb[0].mxu0
      %786 = vmatprep.mubr.bf16.mxu0 %v511
      %787 = vmatmul.mubr.bf16.gmra.mrb[0].mxu0 %v510
      %v788 = vpop.f32.mrb[0].mxu0
      %v789 = vadd.f32 0.0, %v788
      %v790 = vpop.f32.mrb[0].mxu0
      %v791 = vpop.f32.mrb[0].mxu0
      %v792 = vadd.f32 0.0, %v791
      %v793 = vpop.f32.mrb[0].mxu0
      %794 = vmatprep.mubr.bf16.mxu0 %v513
      %795 = vmatmul.mubr.bf16.gmra.mrb[0].mxu0 %v512
      %v796 = vpop.f32.mrb[0].mxu0
      %v797 = vadd.f32 0.0, %v796
      %v798 = vpop.f32.mrb[0].mxu0
      %v799 = vpop.f32.mrb[0].mxu0
      %v800 = vadd.f32 0.0, %v799
      %v801 = vpop.f32.mrb[0].mxu0
      %802 = vdwg.mxu0
      %v803 = vpack.c.bf16 %v680, %v677
      %v804 = vpack.c.bf16 %v688, %v685
      %v805 = vpack.c.bf16 %v696, %v693
      %v806 = vpack.c.bf16 %v704, %v701
      %v807 = vpack.c.bf16 %v712, %v709
      %v808 = vpack.c.bf16 %v720, %v717
      %v809 = vpack.c.bf16 %v728, %v725
      %v810 = vpack.c.bf16 %v736, %v733
      %v811 = vpack.c.bf16 %v744, %v741
      %v812 = vpack.c.bf16 %v752, %v749
      %v813 = vpack.c.bf16 %v760, %v757
      %v814 = vpack.c.bf16 %v768, %v765
      %v815 = vpack.c.bf16 %v776, %v773
      %v816 = vpack.c.bf16 %v784, %v781
      %v817 = vpack.c.bf16 %v792, %v789
      %v818 = vpack.c.bf16 %v800, %v797
      %819 = vrot.lane.b32.xlu0 %v482, 17
      %v820 = vpop.permute.xlu0 %819
      %821 = vrot.lane.b32.xlu0 %v483, 17
      %v822 = vpop.permute.xlu0 %821
      %823 = vrot.lane.b32.xlu0 %v484, 17
      %v824 = vpop.permute.xlu0 %823
      %825 = vrot.lane.b32.xlu0 %v485, 17
      %v826 = vpop.permute.xlu0 %825
      %827 = vrot.lane.b32.xlu0 %v486, 17
      %v828 = vpop.permute.xlu0 %827
      %829 = vrot.lane.b32.xlu0 %v487, 17
      %v830 = vpop.permute.xlu0 %829
      %831 = vrot.lane.b32.xlu0 %v488, 17
      %v832 = vpop.permute.xlu0 %831
      %833 = vrot.lane.b32.xlu0 %v489, 17
      %v834 = vpop.permute.xlu0 %833
      %vm835 = vcmask 138240
      %v836 = vsel %vm835, %v820, %v822
      %v837 = vsel %vm835, %v824, %v826
      %v838 = vsel %vm835, %v828, %v830
      %v839 = vsel %vm835, %v832, %v834
      %vm844 = vcmask 138240
      %v847 = vsel %vm844, 0, %v820
      %v850 = vsel %vm844, 0, %v824
      %v853 = vsel %vm844, 0, %v828
      %v856 = vsel %vm844, 0, %v832
      %v859 = vsel %vm844, %v822, 0
      %v862 = vsel %vm844, %v826, 0
      %v865 = vsel %vm844, %v830, 0
      %v868 = vsel %vm844, %v834, 0
      %v870 = vlaneseq
      %v871 = vand.u32 %v870, 127
      %v872 = vadd.s32 %v871, 128
      %vm873 = vcmp.lt.s32.totalorder %v871, 0
      %v874 = vsub.s32 0, %v871
      %v875 = vsel %vm873, %v874, %v871
      %v876 = vshrl.u32 %v875, 4
      %v877 = vand.u32 %v875, 15
      %v878 = vsub.s32 0, %v877
      %v879 = vsel %vm873, %v878, %v877
      %vm880 = vcmp.lt.s32.totalorder %v872, 0
      %v881 = vsub.s32 0, %v872
      %v882 = vsel %vm880, %v881, %v872
      %v883 = vshrl.u32 %v882, 4
      %v884 = vand.u32 %v882, 15
      %v885 = vsub.s32 0, %v884
      %v886 = vsel %vm880, %v885, %v884
      %vm887 = vcmp.ne.s32.totalorder %v879, 0
      %vm888 = vcmp.ne.s32.totalorder %v886, 0
      %vm889 = vcmp.lt.s32.totalorder %v879, 0
      %vm890 = vcmp.lt.s32.totalorder %v886, 0
      %vm891 = vmand %vm889, %vm887
      %vm892 = vmand %vm890, %vm888
      %v893 = vadd.s32 %v879, 16
      %v894 = vadd.s32 %v886, 16
      %v895 = vsel %vm891, %v893, %v879
      %v896 = vsel %vm892, %v894, %v886
      %vm897 = vcmp.ge.s32.totalorder %v895, 1
      %vm898 = vcmp.ge.s32.totalorder %v896, 1
      %v899 = vsel %vm897, 1, 0
      %v900 = vsel %vm898, 1, 0
      %vm901 = vcmp.eq.s32.totalorder %v899, 1
      %vm902 = vcmp.eq.s32.totalorder %v900, 1
      %vm903 = vcmp.le.s32.totalorder %v895, 14
      %vm904 = vcmp.le.s32.totalorder %v896, 14
      %v905 = vsel %vm903, 1, 0
      %v906 = vsel %vm904, 1, 0
      %vm907 = vcmp.eq.s32.totalorder %v905, 1
      %vm908 = vcmp.eq.s32.totalorder %v906, 1
      %vm909 = vmpackc.low %vm902, %vm901
      %v910 = vsel %vm909, 65537, 0
      %v911 = vlaneseq
      %v912 = vshrl.u32 %v911, 7
      %v913 = vsub.s32 0, %v912
      %v914 = vrot.slane %v910, %v913
      %v915 = vlaneseq
      %v916 = vshrl.u32 %v915, 7
      %v917 = vsub.s32 4, %v916
      %v918 = vrot.slane %v910, %v917
      %vm919 = vcmp.ne.s16.totalorder %v914, 0
      %vm920 = vcmp.ne.s16.totalorder %v918, 0
      %v921 = vsel %vm919, %v847, 0
      %v922 = vsel %vm920, %v836, 0
      %v923 = vsel %vm919, %v850, 0
      %v924 = vsel %vm920, %v837, 0
      %v925 = vsel %vm919, %v853, 0
      %v926 = vsel %vm920, %v838, 0
      %v927 = vsel %vm919, %v856, 0
      %v928 = vsel %vm920, %v839, 0
      %vm929 = vmpackc.low %vm908, %vm907
      %v930 = vsel %vm929, 65537, 0
      %v931 = vlaneseq
      %v932 = vshrl.u32 %v931, 7
      %v933 = vsub.s32 0, %v932
      %v934 = vrot.slane %v930, %v933
      %v935 = vlaneseq
      %v936 = vshrl.u32 %v935, 7
      %v937 = vsub.s32 4, %v936
      %v938 = vrot.slane %v930, %v937
      %939 = vrot.lane.b32.xlu0 %v934, 2
      %v940 = vpop.permute.xlu0 %939
      %941 = vrot.lane.b32.xlu0 %v938, 2
      %v942 = vpop.permute.xlu0 %941
      %vm943 = vcmask 15360
      %v944 = vsel %vm943, %v940, %v942
      %vm945 = vcmp.ne.s16.totalorder %v940, 0
      %vm946 = vcmp.ne.s16.totalorder %v944, 0
      %vm947 = vcmp.ne.s16.totalorder %v942, 0
      %v948 = vsel %vm945, %v847, 0
      %v949 = vsel %vm946, %v836, 0
      %v950 = vsel %vm947, %v859, 0
      %v951 = vsel %vm945, %v850, 0
      %v952 = vsel %vm946, %v837, 0
      %v953 = vsel %vm947, %v862, 0
      %v954 = vsel %vm945, %v853, 0
      %v955 = vsel %vm946, %v838, 0
      %v956 = vsel %vm947, %v865, 0
      %v957 = vsel %vm945, %v856, 0
      %v958 = vsel %vm946, %v839, 0
      %v959 = vsel %vm947, %v868, 0
      %960 = vrot.lane.b32.xlu0 %v914, 16
      %v961 = vpop.permute.xlu0 %960
      %962 = vrot.lane.b32.xlu0 %v918, 16
      %v963 = vpop.permute.xlu0 %962
      %vm964 = vcmask 130048
      %v965 = vsel %vm964, %v961, %v963
      %vm966 = vcmp.ne.s16.totalorder %v961, 0
      %vm967 = vcmp.ne.s16.totalorder %v965, 0
      %vm968 = vcmp.ne.s16.totalorder %v963, 0
      %v969 = vsel %vm966, %v847, 0
      %v970 = vsel %vm967, %v836, 0
      %v971 = vsel %vm968, %v859, 0
      %v972 = vsel %vm966, %v850, 0
      %v973 = vsel %vm967, %v837, 0
      %v974 = vsel %vm968, %v862, 0
      %v975 = vsel %vm966, %v853, 0
      %v976 = vsel %vm967, %v838, 0
      %v977 = vsel %vm968, %v865, 0
      %v978 = vsel %vm966, %v856, 0
      %v979 = vsel %vm967, %v839, 0
      %v980 = vsel %vm968, %v868, 0
      %981 = vrot.lane.b32.xlu0 %v934, 18
      %v982 = vpop.permute.xlu0 %981
      %983 = vrot.lane.b32.xlu0 %v938, 18
      %v984 = vpop.permute.xlu0 %983
      %vm985 = vcmask 146432
      %v986 = vsel %vm985, %v982, %v984
      %vm987 = vcmp.ne.s16.totalorder %v982, 0
      %vm988 = vcmp.ne.s16.totalorder %v986, 0
      %vm989 = vcmp.ne.s16.totalorder %v984, 0
      %v990 = vsel %vm987, %v847, 0
      %v991 = vsel %vm988, %v836, 0
      %v992 = vsel %vm989, %v859, 0
      %v993 = vsel %vm987, %v850, 0
      %v994 = vsel %vm988, %v837, 0
      %v995 = vsel %vm989, %v862, 0
      %v996 = vsel %vm987, %v853, 0
      %v997 = vsel %vm988, %v838, 0
      %v998 = vsel %vm989, %v865, 0
      %v999 = vsel %vm987, %v856, 0
      %v1000 = vsel %vm988, %v839, 0
      %v1001 = vsel %vm989, %v868, 0
      %1002 = vrot.lane.b32.xlu0 %v914, 32
      %v1003 = vpop.permute.xlu0 %1002
      %1004 = vrot.lane.b32.xlu0 %v918, 32
      %v1005 = vpop.permute.xlu0 %1004
      %vm1006 = vcmask 261120
      %v1007 = vsel %vm1006, %v1003, %v1005
      %vm1008 = vcmp.ne.s16.totalorder %v1003, 0
      %vm1009 = vcmp.ne.s16.totalorder %v1007, 0
      %vm1010 = vcmp.ne.s16.totalorder %v1005, 0
      %v1011 = vsel %vm1008, %v847, 0
      %v1012 = vsel %vm1009, %v836, 0
      %v1013 = vsel %vm1010, %v859, 0
      %v1014 = vsel %vm1008, %v850, 0
      %v1015 = vsel %vm1009, %v837, 0
      %v1016 = vsel %vm1010, %v862, 0
      %v1017 = vsel %vm1008, %v853, 0
      %v1018 = vsel %vm1009, %v838, 0
      %v1019 = vsel %vm1010, %v865, 0
      %v1020 = vsel %vm1008, %v856, 0
      %v1021 = vsel %vm1009, %v839, 0
      %v1022 = vsel %vm1010, %v868, 0
      %1023 = vrot.lane.b32.xlu0 %v934, 34
      %v1024 = vpop.permute.xlu0 %1023
      %1025 = vrot.lane.b32.xlu0 %v938, 34
      %v1026 = vpop.permute.xlu0 %1025
      %vm1027 = vcmask 277504
      %v1028 = vsel %vm1027, %v1024, %v1026
      %vm1029 = vcmp.ne.s16.totalorder %v1024, 0
      %vm1030 = vcmp.ne.s16.totalorder %v1028, 0
      %vm1031 = vcmp.ne.s16.totalorder %v1026, 0
      %v1032 = vsel %vm1029, %v847, 0
      %v1033 = vsel %vm1030, %v836, 0
      %v1034 = vsel %vm1031, %v859, 0
      %v1035 = vsel %vm1029, %v850, 0
      %v1036 = vsel %vm1030, %v837, 0
      %v1037 = vsel %vm1031, %v862, 0
      %v1038 = vsel %vm1029, %v853, 0
      %v1039 = vsel %vm1030, %v838, 0
      %v1040 = vsel %vm1031, %v865, 0
      %v1041 = vsel %vm1029, %v856, 0
      %v1042 = vsel %vm1030, %v839, 0
      %v1043 = vsel %vm1031, %v868, 0
      %1052 = vrot.lane.b32.xlu0 %v847, 127
      %v1053 = vpop.permute.xlu0 %1052
      %1054 = vrot.lane.b32.xlu0 %v836, 127
      %v1055 = vpop.permute.xlu0 %1054
      %1056 = vrot.lane.b32.xlu0 %v859, 127
      %v1057 = vpop.permute.xlu0 %1056
      %1058 = vrot.lane.b32.xlu0 %v850, 127
      %v1059 = vpop.permute.xlu0 %1058
      %1060 = vrot.lane.b32.xlu0 %v837, 127
      %v1061 = vpop.permute.xlu0 %1060
      %1062 = vrot.lane.b32.xlu0 %v862, 127
      %v1063 = vpop.permute.xlu0 %1062
      %1064 = vrot.lane.b32.xlu0 %v853, 127
      %v1065 = vpop.permute.xlu0 %1064
      %1066 = vrot.lane.b32.xlu0 %v838, 127
      %v1067 = vpop.permute.xlu0 %1066
      %1068 = vrot.lane.b32.xlu0 %v865, 127
      %v1069 = vpop.permute.xlu0 %1068
      %1070 = vrot.lane.b32.xlu0 %v856, 127
      %v1071 = vpop.permute.xlu0 %1070
      %1072 = vrot.lane.b32.xlu0 %v839, 127
      %v1073 = vpop.permute.xlu0 %1072
      %1074 = vrot.lane.b32.xlu0 %v868, 127
      %v1075 = vpop.permute.xlu0 %1074
      %vm1076 = vcmask 1039360
      %v1077 = vsel %vm1076, %v1053, %v1055
      %v1078 = vsel %vm1076, %v1055, %v1057
      %v1079 = vsel %vm1076, %v1059, %v1061
      %v1080 = vsel %vm1076, %v1061, %v1063
      %v1081 = vsel %vm1076, %v1065, %v1067
      %v1082 = vsel %vm1076, %v1067, %v1069
      %v1083 = vsel %vm1076, %v1071, %v1073
      %v1084 = vsel %vm1076, %v1073, %v1075
      %1105 = vrot.lane.b32.xlu0 %v948, 126
      %v1106 = vpop.permute.xlu0 %1105
      %1107 = vrot.lane.b32.xlu0 %v949, 126
      %v1108 = vpop.permute.xlu0 %1107
      %1109 = vrot.lane.b32.xlu0 %v950, 126
      %v1110 = vpop.permute.xlu0 %1109
      %1111 = vrot.lane.b32.xlu0 %v951, 126
      %v1112 = vpop.permute.xlu0 %1111
      %1113 = vrot.lane.b32.xlu0 %v952, 126
      %v1114 = vpop.permute.xlu0 %1113
      %1115 = vrot.lane.b32.xlu0 %v953, 126
      %v1116 = vpop.permute.xlu0 %1115
      %1117 = vrot.lane.b32.xlu0 %v954, 126
      %v1118 = vpop.permute.xlu0 %1117
      %1119 = vrot.lane.b32.xlu0 %v955, 126
      %v1120 = vpop.permute.xlu0 %1119
      %1121 = vrot.lane.b32.xlu0 %v956, 126
      %v1122 = vpop.permute.xlu0 %1121
      %1123 = vrot.lane.b32.xlu0 %v957, 126
      %v1124 = vpop.permute.xlu0 %1123
      %1125 = vrot.lane.b32.xlu0 %v958, 126
      %v1126 = vpop.permute.xlu0 %1125
      %1127 = vrot.lane.b32.xlu0 %v959, 126
      %v1128 = vpop.permute.xlu0 %1127
      %vm1129 = vcmask 1031168
      %v1130 = vsel %vm1129, %v1106, %v1108
      %v1131 = vsel %vm1129, %v1108, %v1110
      %v1132 = vsel %vm1129, %v1112, %v1114
      %v1133 = vsel %vm1129, %v1114, %v1116
      %v1134 = vsel %vm1129, %v1118, %v1120
      %v1135 = vsel %vm1129, %v1120, %v1122
      %v1136 = vsel %vm1129, %v1124, %v1126
      %v1137 = vsel %vm1129, %v1126, %v1128
      %1158 = vrot.lane.b32.xlu0 %v969, 112
      %v1159 = vpop.permute.xlu0 %1158
      %1160 = vrot.lane.b32.xlu0 %v970, 112
      %v1161 = vpop.permute.xlu0 %1160
      %1162 = vrot.lane.b32.xlu0 %v971, 112
      %v1163 = vpop.permute.xlu0 %1162
      %1164 = vrot.lane.b32.xlu0 %v972, 112
      %v1165 = vpop.permute.xlu0 %1164
      %1166 = vrot.lane.b32.xlu0 %v973, 112
      %v1167 = vpop.permute.xlu0 %1166
      %1168 = vrot.lane.b32.xlu0 %v974, 112
      %v1169 = vpop.permute.xlu0 %1168
      %1170 = vrot.lane.b32.xlu0 %v975, 112
      %v1171 = vpop.permute.xlu0 %1170
      %1172 = vrot.lane.b32.xlu0 %v976, 112
      %v1173 = vpop.permute.xlu0 %1172
      %1174 = vrot.lane.b32.xlu0 %v977, 112
      %v1175 = vpop.permute.xlu0 %1174
      %1176 = vrot.lane.b32.xlu0 %v978, 112
      %v1177 = vpop.permute.xlu0 %1176
      %1178 = vrot.lane.b32.xlu0 %v979, 112
      %v1179 = vpop.permute.xlu0 %1178
      %1180 = vrot.lane.b32.xlu0 %v980, 112
      %v1181 = vpop.permute.xlu0 %1180
      %vm1182 = vcmask 916480
      %v1183 = vsel %vm1182, %v1159, %v1161
      %v1184 = vsel %vm1182, %v1161, %v1163
      %v1185 = vsel %vm1182, %v1165, %v1167
      %v1186 = vsel %vm1182, %v1167, %v1169
      %v1187 = vsel %vm1182, %v1171, %v1173
      %v1188 = vsel %vm1182, %v1173, %v1175
      %v1189 = vsel %vm1182, %v1177, %v1179
      %v1190 = vsel %vm1182, %v1179, %v1181
      %1199 = vrot.lane.b32.xlu0 %v847, 111
      %v1200 = vpop.permute.xlu0 %1199
      %1201 = vrot.lane.b32.xlu0 %v836, 111
      %v1202 = vpop.permute.xlu0 %1201
      %1203 = vrot.lane.b32.xlu0 %v859, 111
      %v1204 = vpop.permute.xlu0 %1203
      %1205 = vrot.lane.b32.xlu0 %v850, 111
      %v1206 = vpop.permute.xlu0 %1205
      %1207 = vrot.lane.b32.xlu0 %v837, 111
      %v1208 = vpop.permute.xlu0 %1207
      %1209 = vrot.lane.b32.xlu0 %v862, 111
      %v1210 = vpop.permute.xlu0 %1209
      %1211 = vrot.lane.b32.xlu0 %v853, 111
      %v1212 = vpop.permute.xlu0 %1211
      %1213 = vrot.lane.b32.xlu0 %v838, 111
      %v1214 = vpop.permute.xlu0 %1213
      %1215 = vrot.lane.b32.xlu0 %v865, 111
      %v1216 = vpop.permute.xlu0 %1215
      %1217 = vrot.lane.b32.xlu0 %v856, 111
      %v1218 = vpop.permute.xlu0 %1217
      %1219 = vrot.lane.b32.xlu0 %v839, 111
      %v1220 = vpop.permute.xlu0 %1219
      %1221 = vrot.lane.b32.xlu0 %v868, 111
      %v1222 = vpop.permute.xlu0 %1221
      %vm1223 = vcmask 908288
      %v1224 = vsel %vm1223, %v1200, %v1202
      %v1225 = vsel %vm1223, %v1202, %v1204
      %v1226 = vsel %vm1223, %v1206, %v1208
      %v1227 = vsel %vm1223, %v1208, %v1210
      %v1228 = vsel %vm1223, %v1212, %v1214
      %v1229 = vsel %vm1223, %v1214, %v1216
      %v1230 = vsel %vm1223, %v1218, %v1220
      %v1231 = vsel %vm1223, %v1220, %v1222
      %1252 = vrot.lane.b32.xlu0 %v990, 110
      %v1253 = vpop.permute.xlu0 %1252
      %1254 = vrot.lane.b32.xlu0 %v991, 110
      %v1255 = vpop.permute.xlu0 %1254
      %1256 = vrot.lane.b32.xlu0 %v992, 110
      %v1257 = vpop.permute.xlu0 %1256
      %1258 = vrot.lane.b32.xlu0 %v993, 110
      %v1259 = vpop.permute.xlu0 %1258
      %1260 = vrot.lane.b32.xlu0 %v994, 110
      %v1261 = vpop.permute.xlu0 %1260
      %1262 = vrot.lane.b32.xlu0 %v995, 110
      %v1263 = vpop.permute.xlu0 %1262
      %1264 = vrot.lane.b32.xlu0 %v996, 110
      %v1265 = vpop.permute.xlu0 %1264
      %1266 = vrot.lane.b32.xlu0 %v997, 110
      %v1267 = vpop.permute.xlu0 %1266
      %1268 = vrot.lane.b32.xlu0 %v998, 110
      %v1269 = vpop.permute.xlu0 %1268
      %1270 = vrot.lane.b32.xlu0 %v999, 110
      %v1271 = vpop.permute.xlu0 %1270
      %1272 = vrot.lane.b32.xlu0 %v1000, 110
      %v1273 = vpop.permute.xlu0 %1272
      %1274 = vrot.lane.b32.xlu0 %v1001, 110
      %v1275 = vpop.permute.xlu0 %1274
      %vm1276 = vcmask 900096
      %v1277 = vsel %vm1276, %v1253, %v1255
      %v1278 = vsel %vm1276, %v1255, %v1257
      %v1279 = vsel %vm1276, %v1259, %v1261
      %v1280 = vsel %vm1276, %v1261, %v1263
      %v1281 = vsel %vm1276, %v1265, %v1267
      %v1282 = vsel %vm1276, %v1267, %v1269
      %v1283 = vsel %vm1276, %v1271, %v1273
      %v1284 = vsel %vm1276, %v1273, %v1275
      %1305 = vrot.lane.b32.xlu0 %v1011, 96
      %v1306 = vpop.permute.xlu0 %1305
      %1307 = vrot.lane.b32.xlu0 %v1012, 96
      %v1308 = vpop.permute.xlu0 %1307
      %1309 = vrot.lane.b32.xlu0 %v1013, 96
      %v1310 = vpop.permute.xlu0 %1309
      %1311 = vrot.lane.b32.xlu0 %v1014, 96
      %v1312 = vpop.permute.xlu0 %1311
      %1313 = vrot.lane.b32.xlu0 %v1015, 96
      %v1314 = vpop.permute.xlu0 %1313
      %1315 = vrot.lane.b32.xlu0 %v1016, 96
      %v1316 = vpop.permute.xlu0 %1315
      %1317 = vrot.lane.b32.xlu0 %v1017, 96
      %v1318 = vpop.permute.xlu0 %1317
      %1319 = vrot.lane.b32.xlu0 %v1018, 96
      %v1320 = vpop.permute.xlu0 %1319
      %1321 = vrot.lane.b32.xlu0 %v1019, 96
      %v1322 = vpop.permute.xlu0 %1321
      %1323 = vrot.lane.b32.xlu0 %v1020, 96
      %v1324 = vpop.permute.xlu0 %1323
      %1325 = vrot.lane.b32.xlu0 %v1021, 96
      %v1326 = vpop.permute.xlu0 %1325
      %1327 = vrot.lane.b32.xlu0 %v1022, 96
      %v1328 = vpop.permute.xlu0 %1327
      %vm1329 = vcmask 785408
      %v1330 = vsel %vm1329, %v1306, %v1308
      %v1331 = vsel %vm1329, %v1308, %v1310
      %v1332 = vsel %vm1329, %v1312, %v1314
      %v1333 = vsel %vm1329, %v1314, %v1316
      %v1334 = vsel %vm1329, %v1318, %v1320
      %v1335 = vsel %vm1329, %v1320, %v1322
      %v1336 = vsel %vm1329, %v1324, %v1326
      %v1337 = vsel %vm1329, %v1326, %v1328
      %1346 = vrot.lane.b32.xlu0 %v847, 95
      %v1347 = vpop.permute.xlu0 %1346
      %1348 = vrot.lane.b32.xlu0 %v836, 95
      %v1349 = vpop.permute.xlu0 %1348
      %1350 = vrot.lane.b32.xlu0 %v859, 95
      %v1351 = vpop.permute.xlu0 %1350
      %1352 = vrot.lane.b32.xlu0 %v850, 95
      %v1353 = vpop.permute.xlu0 %1352
      %1354 = vrot.lane.b32.xlu0 %v837, 95
      %v1355 = vpop.permute.xlu0 %1354
      %1356 = vrot.lane.b32.xlu0 %v862, 95
      %v1357 = vpop.permute.xlu0 %1356
      %1358 = vrot.lane.b32.xlu0 %v853, 95
      %v1359 = vpop.permute.xlu0 %1358
      %1360 = vrot.lane.b32.xlu0 %v838, 95
      %v1361 = vpop.permute.xlu0 %1360
      %1362 = vrot.lane.b32.xlu0 %v865, 95
      %v1363 = vpop.permute.xlu0 %1362
      %1364 = vrot.lane.b32.xlu0 %v856, 95
      %v1365 = vpop.permute.xlu0 %1364
      %1366 = vrot.lane.b32.xlu0 %v839, 95
      %v1367 = vpop.permute.xlu0 %1366
      %1368 = vrot.lane.b32.xlu0 %v868, 95
      %v1369 = vpop.permute.xlu0 %1368
      %vm1370 = vcmask 777216
      %v1371 = vsel %vm1370, %v1347, %v1349
      %v1372 = vsel %vm1370, %v1349, %v1351
      %v1373 = vsel %vm1370, %v1353, %v1355
      %v1374 = vsel %vm1370, %v1355, %v1357
      %v1375 = vsel %vm1370, %v1359, %v1361
      %v1376 = vsel %vm1370, %v1361, %v1363
      %v1377 = vsel %vm1370, %v1365, %v1367
      %v1378 = vsel %vm1370, %v1367, %v1369
      %1399 = vrot.lane.b32.xlu0 %v1032, 94
      %v1400 = vpop.permute.xlu0 %1399
      %1401 = vrot.lane.b32.xlu0 %v1033, 94
      %v1402 = vpop.permute.xlu0 %1401
      %1403 = vrot.lane.b32.xlu0 %v1034, 94
      %v1404 = vpop.permute.xlu0 %1403
      %1405 = vrot.lane.b32.xlu0 %v1035, 94
      %v1406 = vpop.permute.xlu0 %1405
      %1407 = vrot.lane.b32.xlu0 %v1036, 94
      %v1408 = vpop.permute.xlu0 %1407
      %1409 = vrot.lane.b32.xlu0 %v1037, 94
      %v1410 = vpop.permute.xlu0 %1409
      %1411 = vrot.lane.b32.xlu0 %v1038, 94
      %v1412 = vpop.permute.xlu0 %1411
      %1413 = vrot.lane.b32.xlu0 %v1039, 94
      %v1414 = vpop.permute.xlu0 %1413
      %1415 = vrot.lane.b32.xlu0 %v1040, 94
      %v1416 = vpop.permute.xlu0 %1415
      %1417 = vrot.lane.b32.xlu0 %v1041, 94
      %v1418 = vpop.permute.xlu0 %1417
      %1419 = vrot.lane.b32.xlu0 %v1042, 94
      %v1420 = vpop.permute.xlu0 %1419
      %1421 = vrot.lane.b32.xlu0 %v1043, 94
      %v1422 = vpop.permute.xlu0 %1421
      %vm1423 = vcmask 769024
      %v1424 = vsel %vm1423, %v1400, %v1402
      %v1425 = vsel %vm1423, %v1402, %v1404
      %v1426 = vsel %vm1423, %v1406, %v1408
      %v1427 = vsel %vm1423, %v1408, %v1410
      %v1428 = vsel %vm1423, %v1412, %v1414
      %v1429 = vsel %vm1423, %v1414, %v1416
      %v1430 = vsel %vm1423, %v1418, %v1420
      %v1431 = vsel %vm1423, %v1420, %v1422
      %v1440 = vld [vmem:[%s1] sm:$0xff]
      %v1441 = vld [vmem:[%s1 + $0x8] sm:$0x3]
      %v1442 = vld [vmem:[%s2] sm:$0xf]
      %1444 = vset.pattern.permute.xlu0 0
      %1445 = vperm.xlu0 %1444, %v1442
      %v1446 = vpop.permute.xlu0 %1445
      %v1450 = vcombine.high %v1440, %v1440
      %v1452 = vunpack.c.l.s4 1983009808
      %v1453 = vunpack.c.0.s8 %v1452
      %v1454 = vlaneseq
      %v1455 = vshrl.u32 %v1454, 7
      %v1456 = vsub.s32 %v1453, %v1455
      %v1457 = vrot.slane %v1440, %v1456
      %v1459 = vunpack.c.l.s4 1983009808
      %v1460 = vunpack.c.0.s8 %v1459
      %v1461 = vlaneseq
      %v1462 = vshrl.u32 %v1461, 7
      %v1463 = vsub.s32 %v1460, %v1462
      %v1464 = vrot.slane %v1450, %v1463
      %v1465 = vcombine.high %v1457, %v1457
      %v1466 = vcombine.high %v1464, %v1464
      %v1468 = vunpack.c.l.s4 1983009808
      %v1469 = vunpack.c.0.s8 %v1468
      %v1470 = vlaneseq
      %v1471 = vshrl.u32 %v1470, 7
      %v1472 = vsub.s32 %v1469, %v1471
      %v1473 = vrot.slane %v1441, %v1472
      %vm1478 = vcmask 523264
      %v1480 = vsel %vm1478, %v1473, 0
      %1482 = vmatprep.subr.bf16.mxu0 %v922
      %1483 = vmatpush1.bf16.msra.mxu0 %v921
      %1484 = vmatprep.subr.bf16.mxu0 %v924
      %1485 = vmatpush1.bf16.msra.mxu0 %v923
      %1486 = vmatprep.subr.bf16.mxu0 %v926
      %1487 = vmatpush1.bf16.msra.mxu0 %v925
      %1488 = vmatprep.subr.bf16.mxu0 %v928
      %1489 = vmatpush1.bf16.msra.mxu0 %v927
      %1490 = vmatprep.subr.bf16.mxu0 %v1078
      %1491 = vmatpush1.bf16.msra.mxu0 %v1077
      %1492 = vmatprep.subr.bf16.mxu0 %v1080
      %1493 = vmatpush1.bf16.msra.mxu0 %v1079
      %1494 = vmatprep.subr.bf16.mxu0 %v1082
      %1495 = vmatpush1.bf16.msra.mxu0 %v1081
      %1496 = vmatprep.subr.bf16.mxu0 %v1084
      %1497 = vmatpush1.bf16.msra.mxu0 %v1083
      %1498 = vmatprep.subr.bf16.mxu0 %v1131
      %1499 = vmatpush1.bf16.msra.mxu0 %v1130
      %1500 = vmatprep.subr.bf16.mxu0 %v1133
      %1501 = vmatpush1.bf16.msra.mxu0 %v1132
      %1502 = vmatprep.subr.bf16.mxu0 %v1135
      %1503 = vmatpush1.bf16.msra.mxu0 %v1134
      %1504 = vmatprep.subr.bf16.mxu0 %v1137
      %1505 = vmatpush1.bf16.msra.mxu0 %v1136
      %1506 = vmatprep.subr.bf16.mxu0 %v1184
      %1507 = vmatpush1.bf16.msra.mxu0 %v1183
      %1508 = vmatprep.subr.bf16.mxu0 %v1186
      %1509 = vmatpush1.bf16.msra.mxu0 %v1185
      %1510 = vmatprep.subr.bf16.mxu0 %v1188
      %1511 = vmatpush1.bf16.msra.mxu0 %v1187
      %1512 = vmatprep.subr.bf16.mxu0 %v1190
      %1513 = vmatpush1.bf16.msra.mxu0 %v1189
      %1514 = vmatprep.mubr.bf16.mxu0 %v1465
      %1515 = vmatmul.mubr.bf16.gmra.mrb[0].mxu0 %v1457
      %v1516 = vpop.f32.mrb[0].mxu0
      %v1517 = vadd.f32 %v1446, %v1516
      %v1518 = vpop.f32.mrb[0].mxu0
      %v1519 = vadd.f32 %v1446, %v1518
      %v1520 = vpop.f32.mrb[0].mxu0
      %v1521 = vpop.f32.mrb[0].mxu0
      %1522 = vdwg.mxu0
      %1523 = vmatprep.subr.bf16.mxu0 %v1225
      %1524 = vmatpush1.bf16.msra.mxu0 %v1224
      %1525 = vmatprep.subr.bf16.mxu0 %v1227
      %1526 = vmatpush1.bf16.msra.mxu0 %v1226
      %1527 = vmatprep.subr.bf16.mxu0 %v1229
      %1528 = vmatpush1.bf16.msra.mxu0 %v1228
      %1529 = vmatprep.subr.bf16.mxu0 %v1231
      %1530 = vmatpush1.bf16.msra.mxu0 %v1230
      %1531 = vmatprep.subr.bf16.mxu0 %v1278
      %1532 = vmatpush1.bf16.msra.mxu0 %v1277
      %1533 = vmatprep.subr.bf16.mxu0 %v1280
      %1534 = vmatpush1.bf16.msra.mxu0 %v1279
      %1535 = vmatprep.subr.bf16.mxu0 %v1282
      %1536 = vmatpush1.bf16.msra.mxu0 %v1281
      %1537 = vmatprep.subr.bf16.mxu0 %v1284
      %1538 = vmatpush1.bf16.msra.mxu0 %v1283
      %1539 = vmatprep.subr.bf16.mxu0 %v1331
      %1540 = vmatpush1.bf16.msra.mxu0 %v1330
      %1541 = vmatprep.subr.bf16.mxu0 %v1333
      %1542 = vmatpush1.bf16.msra.mxu0 %v1332
      %1543 = vmatprep.subr.bf16.mxu0 %v1335
      %1544 = vmatpush1.bf16.msra.mxu0 %v1334
      %1545 = vmatprep.subr.bf16.mxu0 %v1337
      %1546 = vmatpush1.bf16.msra.mxu0 %v1336
      %1547 = vmatprep.subr.bf16.mxu0 %v1372
      %1548 = vmatpush1.bf16.msra.mxu0 %v1371
      %1549 = vmatprep.subr.bf16.mxu0 %v1374
      %1550 = vmatpush1.bf16.msra.mxu0 %v1373
      %1551 = vmatprep.subr.bf16.mxu0 %v1376
      %1552 = vmatpush1.bf16.msra.mxu0 %v1375
      %1553 = vmatprep.subr.bf16.mxu0 %v1378
      %1554 = vmatpush1.bf16.msra.mxu0 %v1377
      %1555 = vmatprep.mubr.bf16.mxu0 %v1466
      %1556 = vmatmul.mubr.bf16.gmra.mrb[0].mxu0 %v1464
      %v1557 = vpop.f32.mrb[0].mxu0
      %v1558 = vadd.f32 %v1517, %v1557
      %v1559 = vpop.f32.mrb[0].mxu0
      %v1560 = vadd.f32 %v1519, %v1559
      %v1561 = vpop.f32.mrb[0].mxu0
      %v1562 = vpop.f32.mrb[0].mxu0
      %1563 = vdwg.mxu0
      %1564 = vmatprep.subr.bf16.mxu0 %v1425
      %1565 = vmatpush1.bf16.msra.mxu0 %v1424
      %1566 = vmatprep.subr.bf16.mxu0 %v1427
      %1567 = vmatpush1.bf16.msra.mxu0 %v1426
      %1568 = vmatprep.subr.bf16.mxu0 %v1429
      %1569 = vmatpush1.bf16.msra.mxu0 %v1428
      %1570 = vmatprep.subr.bf16.mxu0 %v1431
      %1571 = vmatpush1.bf16.msra.mxu0 %v1430
      %1572 = vmatprep.subr.bf16.mxu0 0
      %1573 = vmatpush1.bf16.msra.mxu0 0
      %1574 = vmatprep.subr.bf16.mxu0 0
      %1575 = vmatpush1.bf16.msra.mxu0 0
      %1576 = vmatprep.subr.bf16.mxu0 0
      %1577 = vmatpush1.bf16.msra.mxu0 0
      %1578 = vmatprep.subr.bf16.mxu0 0
      %1579 = vmatpush1.bf16.msra.mxu0 0
      %1580 = vmatprep.subr.bf16.mxu0 0
      %1581 = vmatpush1.bf16.msra.mxu0 0
      %1582 = vmatprep.subr.bf16.mxu0 0
      %1583 = vmatpush1.bf16.msra.mxu0 0
      %1584 = vmatprep.subr.bf16.mxu0 0
      %1585 = vmatpush1.bf16.msra.mxu0 0
      %1586 = vmatprep.subr.bf16.mxu0 0
      %1587 = vmatpush1.bf16.msra.mxu0 0
      %1588 = vmatprep.subr.bf16.mxu0 0
      %1589 = vmatpush1.bf16.msra.mxu0 0
      %1590 = vmatprep.subr.bf16.mxu0 0
      %1591 = vmatpush1.bf16.msra.mxu0 0
      %1592 = vmatprep.subr.bf16.mxu0 0
      %1593 = vmatpush1.bf16.msra.mxu0 0
      %1594 = vmatprep.subr.bf16.mxu0 0
      %1595 = vmatpush1.bf16.msra.mxu0 0
      %1596 = vmatprep.mubr.bf16.mxu0 0
      %1597 = vmatmul.mubr.bf16.gmra.mrb[0].mxu0 %v1480
      %v1598 = vpop.f32.mrb[0].mxu0
      %v1599 = vadd.f32 %v1558, %v1598
      %v1600 = vpop.f32.mrb[0].mxu0
      %v1601 = vadd.f32 %v1560, %v1600
      %v1602 = vpop.f32.mrb[0].mxu0
      %v1603 = vpop.f32.mrb[0].mxu0
      %1604 = vdwg.mxu0
      %1621 = vrot.lane.b32.xlu0 %v803, 9
      %v1622 = vpop.permute.xlu0 %1621
      %1623 = vrot.lane.b32.xlu0 %v804, 9
      %v1624 = vpop.permute.xlu0 %1623
      %1625 = vrot.lane.b32.xlu0 %v805, 9
      %v1626 = vpop.permute.xlu0 %1625
      %1627 = vrot.lane.b32.xlu0 %v806, 9
      %v1628 = vpop.permute.xlu0 %1627
      %1629 = vrot.lane.b32.xlu0 %v807, 9
      %v1630 = vpop.permute.xlu0 %1629
      %1631 = vrot.lane.b32.xlu0 %v808, 9
      %v1632 = vpop.permute.xlu0 %1631
      %1633 = vrot.lane.b32.xlu0 %v809, 9
      %v1634 = vpop.permute.xlu0 %1633
      %1635 = vrot.lane.b32.xlu0 %v810, 9
      %v1636 = vpop.permute.xlu0 %1635
      %1637 = vrot.lane.b32.xlu0 %v811, 9
      %v1638 = vpop.permute.xlu0 %1637
      %1639 = vrot.lane.b32.xlu0 %v812, 9
      %v1640 = vpop.permute.xlu0 %1639
      %1641 = vrot.lane.b32.xlu0 %v813, 9
      %v1642 = vpop.permute.xlu0 %1641
      %1643 = vrot.lane.b32.xlu0 %v814, 9
      %v1644 = vpop.permute.xlu0 %1643
      %1645 = vrot.lane.b32.xlu0 %v815, 9
      %v1646 = vpop.permute.xlu0 %1645
      %1647 = vrot.lane.b32.xlu0 %v816, 9
      %v1648 = vpop.permute.xlu0 %1647
      %1649 = vrot.lane.b32.xlu0 %v817, 9
      %v1650 = vpop.permute.xlu0 %1649
      %1651 = vrot.lane.b32.xlu0 %v818, 9
      %v1652 = vpop.permute.xlu0 %1651
      %vm1653 = vcmask 72704
      %v1655 = vsel %vm1653, 0, %v1622
      %v1657 = vsel %vm1653, 0, %v1624
      %v1659 = vsel %vm1653, 0, %v1626
      %v1661 = vsel %vm1653, 0, %v1628
      %v1663 = vsel %vm1653, 0, %v1630
      %v1665 = vsel %vm1653, 0, %v1632
      %v1667 = vsel %vm1653, 0, %v1634
      %v1669 = vsel %vm1653, 0, %v1636
      %v1671 = vsel %vm1653, 0, %v1638
      %v1673 = vsel %vm1653, 0, %v1640
      %v1675 = vsel %vm1653, 0, %v1642
      %v1677 = vsel %vm1653, 0, %v1644
      %v1679 = vsel %vm1653, 0, %v1646
      %v1681 = vsel %vm1653, 0, %v1648
      %v1683 = vsel %vm1653, 0, %v1650
      %v1685 = vsel %vm1653, 0, %v1652
      %vm1686 = vcmask 596992
      %v1687 = vsel %vm1686, %v1655, 0
      %v1689 = vsel %vm1686, %v1657, 0
      %v1691 = vsel %vm1686, %v1659, 0
      %v1693 = vsel %vm1686, %v1661, 0
      %v1695 = vsel %vm1686, %v1663, 0
      %v1697 = vsel %vm1686, %v1665, 0
      %v1699 = vsel %vm1686, %v1667, 0
      %v1701 = vsel %vm1686, %v1669, 0
      %v1703 = vsel %vm1686, %v1671, 0
      %v1705 = vsel %vm1686, %v1673, 0
      %v1707 = vsel %vm1686, %v1675, 0
      %v1709 = vsel %vm1686, %v1677, 0
      %v1711 = vsel %vm1686, %v1679, 0
      %v1713 = vsel %vm1686, %v1681, 0
      %v1715 = vsel %vm1686, %v1683, 0
      %v1717 = vsel %vm1686, %v1685, 0
      %vm1719 = vcmp.lt.s32.totalorder %v871, 0
      %v1720 = vsub.s32 0, %v871
      %v1721 = vsel %vm1719, %v1720, %v871
      %v1722 = vshrl.u32 %v1721, 3
      %v1723 = vand.u32 %v1721, 7
      %v1724 = vsub.s32 0, %v1723
      %v1725 = vsel %vm1719, %v1724, %v1723
      %vm1726 = vcmp.ne.s32.totalorder %v1725, 0
      %vm1727 = vcmp.lt.s32.totalorder %v1725, 0
      %vm1728 = vmand %vm1727, %vm1726
      %v1729 = vadd.s32 %v1725, 8
      %v1730 = vsel %vm1728, %v1729, %v1725
      %vm1731 = vcmp.ge.s32.totalorder %v1730, 1
      %v1732 = vsel %vm1731, 1, 0
      %vm1733 = vcmp.eq.s32.totalorder %v1732, 1
      %vm1734 = vcmp.le.s32.totalorder %v1730, 6
      %v1735 = vsel %vm1734, 1, 0
      %vm1736 = vcmp.eq.s32.totalorder %v1735, 1
      %vm1737 = vmpackc.low %vm1733, %vm1733
      %v1738 = vsel %vm1737, 65537, 0
      %v1739 = vlaneseq
      %v1740 = vshrl.u32 %v1739, 7
      %v1741 = vsub.s32 0, %v1740
      %v1742 = vrot.slane %v1738, %v1741
      %vm1743 = vcmp.ne.s16.totalorder %v1742, 0
      %v1744 = vsel %vm1743, %v1687, 0
      %v1745 = vsel %vm1743, %v1689, 0
      %v1746 = vsel %vm1743, %v1691, 0
      %v1747 = vsel %vm1743, %v1693, 0
      %v1748 = vsel %vm1743, %v1695, 0
      %v1749 = vsel %vm1743, %v1697, 0
      %v1750 = vsel %vm1743, %v1699, 0
      %v1751 = vsel %vm1743, %v1701, 0
      %v1752 = vsel %vm1743, %v1703, 0
      %v1753 = vsel %vm1743, %v1705, 0
      %v1754 = vsel %vm1743, %v1707, 0
      %v1755 = vsel %vm1743, %v1709, 0
      %v1756 = vsel %vm1743, %v1711, 0
      %v1757 = vsel %vm1743, %v1713, 0
      %v1758 = vsel %vm1743, %v1715, 0
      %v1759 = vsel %vm1743, %v1717, 0
      %vm1760 = vmpackc.low %vm1736, %vm1736
      %v1761 = vsel %vm1760, 65537, 0
      %v1762 = vlaneseq
      %v1763 = vshrl.u32 %v1762, 7
      %v1764 = vsub.s32 0, %v1763
      %v1765 = vrot.slane %v1761, %v1764
      %1766 = vrot.lane.b32.xlu0 %v1765, 2
      %v1767 = vpop.permute.xlu0 %1766
      %vm1768 = vcmp.ne.s16.totalorder %v1767, 0
      %v1769 = vsel %vm1768, %v1687, 0
      %v1770 = vsel %vm1768, %v1689, 0
      %v1771 = vsel %vm1768, %v1691, 0
      %v1772 = vsel %vm1768, %v1693, 0
      %v1773 = vsel %vm1768, %v1695, 0
      %v1774 = vsel %vm1768, %v1697, 0
      %v1775 = vsel %vm1768, %v1699, 0
      %v1776 = vsel %vm1768, %v1701, 0
      %v1777 = vsel %vm1768, %v1703, 0
      %v1778 = vsel %vm1768, %v1705, 0
      %v1779 = vsel %vm1768, %v1707, 0
      %v1780 = vsel %vm1768, %v1709, 0
      %v1781 = vsel %vm1768, %v1711, 0
      %v1782 = vsel %vm1768, %v1713, 0
      %v1783 = vsel %vm1768, %v1715, 0
      %v1784 = vsel %vm1768, %v1717, 0
      %1785 = vrot.lane.b32.xlu0 %v1742, 8
      %v1786 = vpop.permute.xlu0 %1785
      %vm1787 = vcmp.ne.s16.totalorder %v1786, 0
      %v1788 = vsel %vm1787, %v1687, 0
      %v1789 = vsel %vm1787, %v1689, 0
      %v1790 = vsel %vm1787, %v1691, 0
      %v1791 = vsel %vm1787, %v1693, 0
      %v1792 = vsel %vm1787, %v1695, 0
      %v1793 = vsel %vm1787, %v1697, 0
      %v1794 = vsel %vm1787, %v1699, 0
      %v1795 = vsel %vm1787, %v1701, 0
      %v1796 = vsel %vm1787, %v1703, 0
      %v1797 = vsel %vm1787, %v1705, 0
      %v1798 = vsel %vm1787, %v1707, 0
      %v1799 = vsel %vm1787, %v1709, 0
      %v1800 = vsel %vm1787, %v1711, 0
      %v1801 = vsel %vm1787, %v1713, 0
      %v1802 = vsel %vm1787, %v1715, 0
      %v1803 = vsel %vm1787, %v1717, 0
      %1804 = vrot.lane.b32.xlu0 %v1765, 10
      %v1805 = vpop.permute.xlu0 %1804
      %vm1806 = vcmp.ne.s16.totalorder %v1805, 0
      %v1807 = vsel %vm1806, %v1687, 0
      %v1808 = vsel %vm1806, %v1689, 0
      %v1809 = vsel %vm1806, %v1691, 0
      %v1810 = vsel %vm1806, %v1693, 0
      %v1811 = vsel %vm1806, %v1695, 0
      %v1812 = vsel %vm1806, %v1697, 0
      %v1813 = vsel %vm1806, %v1699, 0
      %v1814 = vsel %vm1806, %v1701, 0
      %v1815 = vsel %vm1806, %v1703, 0
      %v1816 = vsel %vm1806, %v1705, 0
      %v1817 = vsel %vm1806, %v1707, 0
      %v1818 = vsel %vm1806, %v1709, 0
      %v1819 = vsel %vm1806, %v1711, 0
      %v1820 = vsel %vm1806, %v1713, 0
      %v1821 = vsel %vm1806, %v1715, 0
      %v1822 = vsel %vm1806, %v1717, 0
      %1823 = vrot.lane.b32.xlu0 %v1742, 16
      %v1824 = vpop.permute.xlu0 %1823
      %vm1825 = vcmp.ne.s16.totalorder %v1824, 0
      %v1826 = vsel %vm1825, %v1687, 0
      %v1827 = vsel %vm1825, %v1689, 0
      %v1828 = vsel %vm1825, %v1691, 0
      %v1829 = vsel %vm1825, %v1693, 0
      %v1830 = vsel %vm1825, %v1695, 0
      %v1831 = vsel %vm1825, %v1697, 0
      %v1832 = vsel %vm1825, %v1699, 0
      %v1833 = vsel %vm1825, %v1701, 0
      %v1834 = vsel %vm1825, %v1703, 0
      %v1835 = vsel %vm1825, %v1705, 0
      %v1836 = vsel %vm1825, %v1707, 0
      %v1837 = vsel %vm1825, %v1709, 0
      %v1838 = vsel %vm1825, %v1711, 0
      %v1839 = vsel %vm1825, %v1713, 0
      %v1840 = vsel %vm1825, %v1715, 0
      %v1841 = vsel %vm1825, %v1717, 0
      %1842 = vrot.lane.b32.xlu0 %v1765, 18
      %v1843 = vpop.permute.xlu0 %1842
      %vm1844 = vcmp.ne.s16.totalorder %v1843, 0
      %v1845 = vsel %vm1844, %v1687, 0
      %v1846 = vsel %vm1844, %v1689, 0
      %v1847 = vsel %vm1844, %v1691, 0
      %v1848 = vsel %vm1844, %v1693, 0
      %v1849 = vsel %vm1844, %v1695, 0
      %v1850 = vsel %vm1844, %v1697, 0
      %v1851 = vsel %vm1844, %v1699, 0
      %v1852 = vsel %vm1844, %v1701, 0
      %v1853 = vsel %vm1844, %v1703, 0
      %v1854 = vsel %vm1844, %v1705, 0
      %v1855 = vsel %vm1844, %v1707, 0
      %v1856 = vsel %vm1844, %v1709, 0
      %v1857 = vsel %vm1844, %v1711, 0
      %v1858 = vsel %vm1844, %v1713, 0
      %v1859 = vsel %vm1844, %v1715, 0
      %v1860 = vsel %vm1844, %v1717, 0
      %1877 = vrot.lane.b32.xlu0 %v1687, 127
      %v1878 = vpop.permute.xlu0 %1877
      %1879 = vrot.lane.b32.xlu0 %v1689, 127
      %v1880 = vpop.permute.xlu0 %1879
      %1881 = vrot.lane.b32.xlu0 %v1691, 127
      %v1882 = vpop.permute.xlu0 %1881
      %1883 = vrot.lane.b32.xlu0 %v1693, 127
      %v1884 = vpop.permute.xlu0 %1883
      %1885 = vrot.lane.b32.xlu0 %v1695, 127
      %v1886 = vpop.permute.xlu0 %1885
      %1887 = vrot.lane.b32.xlu0 %v1697, 127
      %v1888 = vpop.permute.xlu0 %1887
      %1889 = vrot.lane.b32.xlu0 %v1699, 127
      %v1890 = vpop.permute.xlu0 %1889
      %1891 = vrot.lane.b32.xlu0 %v1701, 127
      %v1892 = vpop.permute.xlu0 %1891
      %1893 = vrot.lane.b32.xlu0 %v1703, 127
      %v1894 = vpop.permute.xlu0 %1893
      %1895 = vrot.lane.b32.xlu0 %v1705, 127
      %v1896 = vpop.permute.xlu0 %1895
      %1897 = vrot.lane.b32.xlu0 %v1707, 127
      %v1898 = vpop.permute.xlu0 %1897
      %1899 = vrot.lane.b32.xlu0 %v1709, 127
      %v1900 = vpop.permute.xlu0 %1899
      %1901 = vrot.lane.b32.xlu0 %v1711, 127
      %v1902 = vpop.permute.xlu0 %1901
      %1903 = vrot.lane.b32.xlu0 %v1713, 127
      %v1904 = vpop.permute.xlu0 %1903
      %1905 = vrot.lane.b32.xlu0 %v1715, 127
      %v1906 = vpop.permute.xlu0 %1905
      %1907 = vrot.lane.b32.xlu0 %v1717, 127
      %v1908 = vpop.permute.xlu0 %1907
      %1941 = vrot.lane.b32.xlu0 %v1769, 126
      %v1942 = vpop.permute.xlu0 %1941
      %1943 = vrot.lane.b32.xlu0 %v1770, 126
      %v1944 = vpop.permute.xlu0 %1943
      %1945 = vrot.lane.b32.xlu0 %v1771, 126
      %v1946 = vpop.permute.xlu0 %1945
      %1947 = vrot.lane.b32.xlu0 %v1772, 126
      %v1948 = vpop.permute.xlu0 %1947
      %1949 = vrot.lane.b32.xlu0 %v1773, 126
      %v1950 = vpop.permute.xlu0 %1949
      %1951 = vrot.lane.b32.xlu0 %v1774, 126
      %v1952 = vpop.permute.xlu0 %1951
      %1953 = vrot.lane.b32.xlu0 %v1775, 126
      %v1954 = vpop.permute.xlu0 %1953
      %1955 = vrot.lane.b32.xlu0 %v1776, 126
      %v1956 = vpop.permute.xlu0 %1955
      %1957 = vrot.lane.b32.xlu0 %v1777, 126
      %v1958 = vpop.permute.xlu0 %1957
      %1959 = vrot.lane.b32.xlu0 %v1778, 126
      %v1960 = vpop.permute.xlu0 %1959
      %1961 = vrot.lane.b32.xlu0 %v1779, 126
      %v1962 = vpop.permute.xlu0 %1961
      %1963 = vrot.lane.b32.xlu0 %v1780, 126
      %v1964 = vpop.permute.xlu0 %1963
      %1965 = vrot.lane.b32.xlu0 %v1781, 126
      %v1966 = vpop.permute.xlu0 %1965
      %1967 = vrot.lane.b32.xlu0 %v1782, 126
      %v1968 = vpop.permute.xlu0 %1967
      %1969 = vrot.lane.b32.xlu0 %v1783, 126
      %v1970 = vpop.permute.xlu0 %1969
      %1971 = vrot.lane.b32.xlu0 %v1784, 126
      %v1972 = vpop.permute.xlu0 %1971
      %2005 = vrot.lane.b32.xlu0 %v1788, 120
      %v2006 = vpop.permute.xlu0 %2005
      %2007 = vrot.lane.b32.xlu0 %v1789, 120
      %v2008 = vpop.permute.xlu0 %2007
      %2009 = vrot.lane.b32.xlu0 %v1790, 120
      %v2010 = vpop.permute.xlu0 %2009
      %2011 = vrot.lane.b32.xlu0 %v1791, 120
      %v2012 = vpop.permute.xlu0 %2011
      %2013 = vrot.lane.b32.xlu0 %v1792, 120
      %v2014 = vpop.permute.xlu0 %2013
      %2015 = vrot.lane.b32.xlu0 %v1793, 120
      %v2016 = vpop.permute.xlu0 %2015
      %2017 = vrot.lane.b32.xlu0 %v1794, 120
      %v2018 = vpop.permute.xlu0 %2017
      %2019 = vrot.lane.b32.xlu0 %v1795, 120
      %v2020 = vpop.permute.xlu0 %2019
      %2021 = vrot.lane.b32.xlu0 %v1796, 120
      %v2022 = vpop.permute.xlu0 %2021
      %2023 = vrot.lane.b32.xlu0 %v1797, 120
      %v2024 = vpop.permute.xlu0 %2023
      %2025 = vrot.lane.b32.xlu0 %v1798, 120
      %v2026 = vpop.permute.xlu0 %2025
      %2027 = vrot.lane.b32.xlu0 %v1799, 120
      %v2028 = vpop.permute.xlu0 %2027
      %2029 = vrot.lane.b32.xlu0 %v1800, 120
      %v2030 = vpop.permute.xlu0 %2029
      %2031 = vrot.lane.b32.xlu0 %v1801, 120
      %v2032 = vpop.permute.xlu0 %2031
      %2033 = vrot.lane.b32.xlu0 %v1802, 120
      %v2034 = vpop.permute.xlu0 %2033
      %2035 = vrot.lane.b32.xlu0 %v1803, 120
      %v2036 = vpop.permute.xlu0 %2035
      %2053 = vrot.lane.b32.xlu0 %v1687, 119
      %v2054 = vpop.permute.xlu0 %2053
      %2055 = vrot.lane.b32.xlu0 %v1689, 119
      %v2056 = vpop.permute.xlu0 %2055
      %2057 = vrot.lane.b32.xlu0 %v1691, 119
      %v2058 = vpop.permute.xlu0 %2057
      %2059 = vrot.lane.b32.xlu0 %v1693, 119
      %v2060 = vpop.permute.xlu0 %2059
      %2061 = vrot.lane.b32.xlu0 %v1695, 119
      %v2062 = vpop.permute.xlu0 %2061
      %2063 = vrot.lane.b32.xlu0 %v1697, 119
      %v2064 = vpop.permute.xlu0 %2063
      %2065 = vrot.lane.b32.xlu0 %v1699, 119
      %v2066 = vpop.permute.xlu0 %2065
      %2067 = vrot.lane.b32.xlu0 %v1701, 119
      %v2068 = vpop.permute.xlu0 %2067
      %2069 = vrot.lane.b32.xlu0 %v1703, 119
      %v2070 = vpop.permute.xlu0 %2069
      %2071 = vrot.lane.b32.xlu0 %v1705, 119
      %v2072 = vpop.permute.xlu0 %2071
      %2073 = vrot.lane.b32.xlu0 %v1707, 119
      %v2074 = vpop.permute.xlu0 %2073
      %2075 = vrot.lane.b32.xlu0 %v1709, 119
      %v2076 = vpop.permute.xlu0 %2075
      %2077 = vrot.lane.b32.xlu0 %v1711, 119
      %v2078 = vpop.permute.xlu0 %2077
      %2079 = vrot.lane.b32.xlu0 %v1713, 119
      %v2080 = vpop.permute.xlu0 %2079
      %2081 = vrot.lane.b32.xlu0 %v1715, 119
      %v2082 = vpop.permute.xlu0 %2081
      %2083 = vrot.lane.b32.xlu0 %v1717, 119
      %v2084 = vpop.permute.xlu0 %2083
      %2117 = vrot.lane.b32.xlu0 %v1807, 118
      %v2118 = vpop.permute.xlu0 %2117
      %2119 = vrot.lane.b32.xlu0 %v1808, 118
      %v2120 = vpop.permute.xlu0 %2119
      %2121 = vrot.lane.b32.xlu0 %v1809, 118
      %v2122 = vpop.permute.xlu0 %2121
      %2123 = vrot.lane.b32.xlu0 %v1810, 118
      %v2124 = vpop.permute.xlu0 %2123
      %2125 = vrot.lane.b32.xlu0 %v1811, 118
      %v2126 = vpop.permute.xlu0 %2125
      %2127 = vrot.lane.b32.xlu0 %v1812, 118
      %v2128 = vpop.permute.xlu0 %2127
      %2129 = vrot.lane.b32.xlu0 %v1813, 118
      %v2130 = vpop.permute.xlu0 %2129
      %2131 = vrot.lane.b32.xlu0 %v1814, 118
      %v2132 = vpop.permute.xlu0 %2131
      %2133 = vrot.lane.b32.xlu0 %v1815, 118
      %v2134 = vpop.permute.xlu0 %2133
      %2135 = vrot.lane.b32.xlu0 %v1816, 118
      %v2136 = vpop.permute.xlu0 %2135
      %2137 = vrot.lane.b32.xlu0 %v1817, 118
      %v2138 = vpop.permute.xlu0 %2137
      %2139 = vrot.lane.b32.xlu0 %v1818, 118
      %v2140 = vpop.permute.xlu0 %2139
      %2141 = vrot.lane.b32.xlu0 %v1819, 118
      %v2142 = vpop.permute.xlu0 %2141
      %2143 = vrot.lane.b32.xlu0 %v1820, 118
      %v2144 = vpop.permute.xlu0 %2143
      %2145 = vrot.lane.b32.xlu0 %v1821, 118
      %v2146 = vpop.permute.xlu0 %2145
      %2147 = vrot.lane.b32.xlu0 %v1822, 118
      %v2148 = vpop.permute.xlu0 %2147
      %2181 = vrot.lane.b32.xlu0 %v1826, 112
      %v2182 = vpop.permute.xlu0 %2181
      %2183 = vrot.lane.b32.xlu0 %v1827, 112
      %v2184 = vpop.permute.xlu0 %2183
      %2185 = vrot.lane.b32.xlu0 %v1828, 112
      %v2186 = vpop.permute.xlu0 %2185
      %2187 = vrot.lane.b32.xlu0 %v1829, 112
      %v2188 = vpop.permute.xlu0 %2187
      %2189 = vrot.lane.b32.xlu0 %v1830, 112
      %v2190 = vpop.permute.xlu0 %2189
      %2191 = vrot.lane.b32.xlu0 %v1831, 112
      %v2192 = vpop.permute.xlu0 %2191
      %2193 = vrot.lane.b32.xlu0 %v1832, 112
      %v2194 = vpop.permute.xlu0 %2193
      %2195 = vrot.lane.b32.xlu0 %v1833, 112
      %v2196 = vpop.permute.xlu0 %2195
      %2197 = vrot.lane.b32.xlu0 %v1834, 112
      %v2198 = vpop.permute.xlu0 %2197
      %2199 = vrot.lane.b32.xlu0 %v1835, 112
      %v2200 = vpop.permute.xlu0 %2199
      %2201 = vrot.lane.b32.xlu0 %v1836, 112
      %v2202 = vpop.permute.xlu0 %2201
      %2203 = vrot.lane.b32.xlu0 %v1837, 112
      %v2204 = vpop.permute.xlu0 %2203
      %2205 = vrot.lane.b32.xlu0 %v1838, 112
      %v2206 = vpop.permute.xlu0 %2205
      %2207 = vrot.lane.b32.xlu0 %v1839, 112
      %v2208 = vpop.permute.xlu0 %2207
      %2209 = vrot.lane.b32.xlu0 %v1840, 112
      %v2210 = vpop.permute.xlu0 %2209
      %2211 = vrot.lane.b32.xlu0 %v1841, 112
      %v2212 = vpop.permute.xlu0 %2211
      %2229 = vrot.lane.b32.xlu0 %v1687, 111
      %v2230 = vpop.permute.xlu0 %2229
      %2231 = vrot.lane.b32.xlu0 %v1689, 111
      %v2232 = vpop.permute.xlu0 %2231
      %2233 = vrot.lane.b32.xlu0 %v1691, 111
      %v2234 = vpop.permute.xlu0 %2233
      %2235 = vrot.lane.b32.xlu0 %v1693, 111
      %v2236 = vpop.permute.xlu0 %2235
      %2237 = vrot.lane.b32.xlu0 %v1695, 111
      %v2238 = vpop.permute.xlu0 %2237
      %2239 = vrot.lane.b32.xlu0 %v1697, 111
      %v2240 = vpop.permute.xlu0 %2239
      %2241 = vrot.lane.b32.xlu0 %v1699, 111
      %v2242 = vpop.permute.xlu0 %2241
      %2243 = vrot.lane.b32.xlu0 %v1701, 111
      %v2244 = vpop.permute.xlu0 %2243
      %2245 = vrot.lane.b32.xlu0 %v1703, 111
      %v2246 = vpop.permute.xlu0 %2245
      %2247 = vrot.lane.b32.xlu0 %v1705, 111
      %v2248 = vpop.permute.xlu0 %2247
      %2249 = vrot.lane.b32.xlu0 %v1707, 111
      %v2250 = vpop.permute.xlu0 %2249
      %2251 = vrot.lane.b32.xlu0 %v1709, 111
      %v2252 = vpop.permute.xlu0 %2251
      %2253 = vrot.lane.b32.xlu0 %v1711, 111
      %v2254 = vpop.permute.xlu0 %2253
      %2255 = vrot.lane.b32.xlu0 %v1713, 111
      %v2256 = vpop.permute.xlu0 %2255
      %2257 = vrot.lane.b32.xlu0 %v1715, 111
      %v2258 = vpop.permute.xlu0 %2257
      %2259 = vrot.lane.b32.xlu0 %v1717, 111
      %v2260 = vpop.permute.xlu0 %2259
      %2293 = vrot.lane.b32.xlu0 %v1845, 110
      %v2294 = vpop.permute.xlu0 %2293
      %2295 = vrot.lane.b32.xlu0 %v1846, 110
      %v2296 = vpop.permute.xlu0 %2295
      %2297 = vrot.lane.b32.xlu0 %v1847, 110
      %v2298 = vpop.permute.xlu0 %2297
      %2299 = vrot.lane.b32.xlu0 %v1848, 110
      %v2300 = vpop.permute.xlu0 %2299
      %2301 = vrot.lane.b32.xlu0 %v1849, 110
      %v2302 = vpop.permute.xlu0 %2301
      %2303 = vrot.lane.b32.xlu0 %v1850, 110
      %v2304 = vpop.permute.xlu0 %2303
      %2305 = vrot.lane.b32.xlu0 %v1851, 110
      %v2306 = vpop.permute.xlu0 %2305
      %2307 = vrot.lane.b32.xlu0 %v1852, 110
      %v2308 = vpop.permute.xlu0 %2307
      %2309 = vrot.lane.b32.xlu0 %v1853, 110
      %v2310 = vpop.permute.xlu0 %2309
      %2311 = vrot.lane.b32.xlu0 %v1854, 110
      %v2312 = vpop.permute.xlu0 %2311
      %2313 = vrot.lane.b32.xlu0 %v1855, 110
      %v2314 = vpop.permute.xlu0 %2313
      %2315 = vrot.lane.b32.xlu0 %v1856, 110
      %v2316 = vpop.permute.xlu0 %2315
      %2317 = vrot.lane.b32.xlu0 %v1857, 110
      %v2318 = vpop.permute.xlu0 %2317
      %2319 = vrot.lane.b32.xlu0 %v1858, 110
      %v2320 = vpop.permute.xlu0 %2319
      %2321 = vrot.lane.b32.xlu0 %v1859, 110
      %v2322 = vpop.permute.xlu0 %2321
      %2323 = vrot.lane.b32.xlu0 %v1860, 110
      %v2324 = vpop.permute.xlu0 %2323
      %v2341 = vld [vmem:[%s3] sm:$0xff]
      %v2342 = vld [vmem:[%s3 + $0x8] sm:$0xff]
      %v2343 = vld [vmem:[%s3 + $0x10] sm:$0xff]
      %v2344 = vld [vmem:[%s3 + $0x18] sm:$0xff]
      %v2345 = vld [vmem:[%s3 + $0x20] sm:$0xff]
      %v2346 = vld [vmem:[%s3 + $0x28] sm:$0xff]
      %v2347 = vld [vmem:[%s3 + $0x30] sm:$0xff]
      %v2348 = vld [vmem:[%s3 + $0x38] sm:$0xff]
      %v2349 = vld [vmem:[%s3 + $0x40] sm:$0xff]
      %v2350 = vld [vmem:[%s3 + $0x48] sm:$0xff]
      %v2351 = vld [vmem:[%s3 + $0x50] sm:$0xff]
      %v2352 = vld [vmem:[%s3 + $0x58] sm:$0xff]
      %v2353 = vld [vmem:[%s3 + $0x60] sm:$0xff]
      %v2354 = vld [vmem:[%s3 + $0x68] sm:$0xff]
      %v2355 = vld [vmem:[%s3 + $0x70] sm:$0xff]
      %v2356 = vld [vmem:[%s3 + $0x78] sm:$0xff]
      %v2357 = vld [vmem:[%s3 + $0x80] sm:$0xff]
      %v2358 = vld [vmem:[%s3 + $0x88] sm:$0xff]
      %v2359 = vld [vmem:[%s4] sm:$0xff]
      %v2360 = vld [vmem:[%s4 + $0x8] sm:$0xff]
      %2362 = vset.pattern.permute.xlu0 0
      %2363 = vperm.xlu0 %2362, %v2359
      %v2364 = vpop.permute.xlu0 %2363
      %2367 = vset.pattern.permute.xlu0 0
      %2368 = vperm.xlu0 %2367, %v2360
      %v2369 = vpop.permute.xlu0 %2368
      %v2389 = vunpack.c.l.b16 %v2341
      %v2390 = vunpack.c.h.b16 %v2341
      %v2391 = vunpack.c.l.b16 %v2342
      %v2392 = vunpack.c.h.b16 %v2342
      %v2393 = vunpack.c.l.b16 %v2343
      %v2394 = vunpack.c.h.b16 %v2343
      %v2395 = vunpack.c.l.b16 %v2344
      %v2396 = vunpack.c.h.b16 %v2344
      %v2397 = vunpack.c.l.b16 %v2345
      %v2398 = vunpack.c.h.b16 %v2345
      %v2399 = vunpack.c.l.b16 %v2346
      %v2400 = vunpack.c.h.b16 %v2346
      %v2401 = vunpack.c.l.b16 %v2347
      %v2402 = vunpack.c.h.b16 %v2347
      %v2403 = vunpack.c.l.b16 %v2348
      %v2404 = vunpack.c.h.b16 %v2348
      %v2405 = vunpack.c.l.b16 %v2349
      %v2406 = vunpack.c.h.b16 %v2349
      %v2407 = vunpack.c.l.b16 %v2350
      %v2408 = vunpack.c.h.b16 %v2350
      %v2409 = vunpack.c.l.b16 %v2351
      %v2410 = vunpack.c.h.b16 %v2351
      %v2411 = vunpack.c.l.b16 %v2352
      %v2412 = vunpack.c.h.b16 %v2352
      %v2413 = vunpack.c.l.b16 %v2353
      %v2414 = vunpack.c.h.b16 %v2353
      %v2415 = vunpack.c.l.b16 %v2354
      %v2416 = vunpack.c.h.b16 %v2354
      %v2417 = vunpack.c.l.b16 %v2355
      %v2418 = vunpack.c.h.b16 %v2355
      %v2419 = vunpack.c.l.b16 %v2356
      %v2420 = vunpack.c.h.b16 %v2356
      %v2421 = vunpack.c.l.b16 %v2357
      %v2422 = vunpack.c.h.b16 %v2357
      %v2423 = vunpack.c.l.b16 %v2358
      %v2424 = vunpack.c.h.b16 %v2358
      %v2425 = vpack.c.b16 %v2407, %v2389
      %v2426 = vpack.c.b16 %v2408, %v2390
      %v2427 = vpack.c.b16 %v2409, %v2391
      %v2428 = vpack.c.b16 %v2410, %v2392
      %v2429 = vpack.c.b16 %v2411, %v2393
      %v2430 = vpack.c.b16 %v2412, %v2394
      %v2431 = vpack.c.b16 %v2413, %v2395
      %v2432 = vpack.c.b16 %v2414, %v2396
      %v2433 = vpack.c.b16 %v2415, %v2397
      %v2434 = vpack.c.b16 %v2416, %v2398
      %v2435 = vpack.c.b16 %v2417, %v2399
      %v2436 = vpack.c.b16 %v2418, %v2400
      %v2437 = vpack.c.b16 %v2419, %v2401
      %v2438 = vpack.c.b16 %v2420, %v2402
      %v2439 = vpack.c.b16 %v2421, %v2403
      %v2440 = vpack.c.b16 %v2422, %v2404
      %v2441 = vpack.c.b16 %v2423, %v2405
      %v2442 = vpack.c.b16 %v2424, %v2406
      %2461 = vmatprep.subr.bf16.mxu0 0
      %2462 = vmatpush1.bf16.msra.mxu0 %v1744
      %2463 = vmatprep.subr.bf16.mxu0 0
      %2464 = vmatpush1.bf16.msra.mxu0 %v1745
      %2465 = vmatprep.subr.bf16.mxu0 0
      %2466 = vmatpush1.bf16.msra.mxu0 %v1746
      %2467 = vmatprep.subr.bf16.mxu0 0
      %2468 = vmatpush1.bf16.msra.mxu0 %v1747
      %2469 = vmatprep.subr.bf16.mxu0 0
      %2470 = vmatpush1.bf16.msra.mxu0 %v1748
      %2471 = vmatprep.subr.bf16.mxu0 0
      %2472 = vmatpush1.bf16.msra.mxu0 %v1749
      %2473 = vmatprep.subr.bf16.mxu0 0
      %2474 = vmatpush1.bf16.msra.mxu0 %v1750
      %2475 = vmatprep.subr.bf16.mxu0 0
      %2476 = vmatpush1.bf16.msra.mxu0 %v1751
      %2477 = vmatprep.subr.bf16.mxu0 0
      %2478 = vmatpush1.bf16.msra.mxu0 %v1752
      %2479 = vmatprep.subr.bf16.mxu0 0
      %2480 = vmatpush1.bf16.msra.mxu0 %v1753
      %2481 = vmatprep.subr.bf16.mxu0 0
      %2482 = vmatpush1.bf16.msra.mxu0 %v1754
      %2483 = vmatprep.subr.bf16.mxu0 0
      %2484 = vmatpush1.bf16.msra.mxu0 %v1755
      %2485 = vmatprep.subr.bf16.mxu0 0
      %2486 = vmatpush1.bf16.msra.mxu0 %v1756
      %2487 = vmatprep.subr.bf16.mxu0 0
      %2488 = vmatpush1.bf16.msra.mxu0 %v1757
      %2489 = vmatprep.subr.bf16.mxu0 0
      %2490 = vmatpush1.bf16.msra.mxu0 %v1758
      %2491 = vmatprep.subr.bf16.mxu0 0
      %2492 = vmatpush1.bf16.msra.mxu0 %v1759
      %2493 = vmatprep.mubr.bf16.mxu0 %v2426
      %2494 = vmatmul.mubr.bf16.gmra.mrb[0].mxu0 %v2425
      %v2495 = vpop.f32.mrb[0].mxu0
      %v2496 = vadd.f32 %v2364, %v2495
      %v2497 = vpop.f32.mrb[0].mxu0
      %v2498 = vpop.f32.mrb[0].mxu0
      %v2499 = vadd.f32 %v2369, %v2498
      %v2500 = vpop.f32.mrb[0].mxu0
      %2501 = vdwg.mxu0
      %2502 = vmatprep.subr.bf16.mxu0 0
      %2503 = vmatpush1.bf16.msra.mxu0 %v1878
      %2504 = vmatprep.subr.bf16.mxu0 0
      %2505 = vmatpush1.bf16.msra.mxu0 %v1880
      %2506 = vmatprep.subr.bf16.mxu0 0
      %2507 = vmatpush1.bf16.msra.mxu0 %v1882
      %2508 = vmatprep.subr.bf16.mxu0 0
      %2509 = vmatpush1.bf16.msra.mxu0 %v1884
      %2510 = vmatprep.subr.bf16.mxu0 0
      %2511 = vmatpush1.bf16.msra.mxu0 %v1886
      %2512 = vmatprep.subr.bf16.mxu0 0
      %2513 = vmatpush1.bf16.msra.mxu0 %v1888
      %2514 = vmatprep.subr.bf16.mxu0 0
      %2515 = vmatpush1.bf16.msra.mxu0 %v1890
      %2516 = vmatprep.subr.bf16.mxu0 0
      %2517 = vmatpush1.bf16.msra.mxu0 %v1892
      %2518 = vmatprep.subr.bf16.mxu0 0
      %2519 = vmatpush1.bf16.msra.mxu0 %v1894
      %2520 = vmatprep.subr.bf16.mxu0 0
      %2521 = vmatpush1.bf16.msra.mxu0 %v1896
      %2522 = vmatprep.subr.bf16.mxu0 0
      %2523 = vmatpush1.bf16.msra.mxu0 %v1898
      %2524 = vmatprep.subr.bf16.mxu0 0
      %2525 = vmatpush1.bf16.msra.mxu0 %v1900
      %2526 = vmatprep.subr.bf16.mxu0 0
      %2527 = vmatpush1.bf16.msra.mxu0 %v1902
      %2528 = vmatprep.subr.bf16.mxu0 0
      %2529 = vmatpush1.bf16.msra.mxu0 %v1904
      %2530 = vmatprep.subr.bf16.mxu0 0
      %2531 = vmatpush1.bf16.msra.mxu0 %v1906
      %2532 = vmatprep.subr.bf16.mxu0 0
      %2533 = vmatpush1.bf16.msra.mxu0 %v1908
      %2534 = vmatprep.mubr.bf16.mxu0 %v2428
      %2535 = vmatmul.mubr.bf16.gmra.mrb[0].mxu0 %v2427
      %v2536 = vpop.f32.mrb[0].mxu0
      %v2537 = vadd.f32 %v2496, %v2536
      %v2538 = vpop.f32.mrb[0].mxu0
      %v2539 = vpop.f32.mrb[0].mxu0
      %v2540 = vadd.f32 %v2499, %v2539
      %v2541 = vpop.f32.mrb[0].mxu0
      %2542 = vdwg.mxu0
      %2543 = vmatprep.subr.bf16.mxu0 0
      %2544 = vmatpush1.bf16.msra.mxu0 %v1942
      %2545 = vmatprep.subr.bf16.mxu0 0
      %2546 = vmatpush1.bf16.msra.mxu0 %v1944
      %2547 = vmatprep.subr.bf16.mxu0 0
      %2548 = vmatpush1.bf16.msra.mxu0 %v1946
      %2549 = vmatprep.subr.bf16.mxu0 0
      %2550 = vmatpush1.bf16.msra.mxu0 %v1948
      %2551 = vmatprep.subr.bf16.mxu0 0
      %2552 = vmatpush1.bf16.msra.mxu0 %v1950
      %2553 = vmatprep.subr.bf16.mxu0 0
      %2554 = vmatpush1.bf16.msra.mxu0 %v1952
      %2555 = vmatprep.subr.bf16.mxu0 0
      %2556 = vmatpush1.bf16.msra.mxu0 %v1954
      %2557 = vmatprep.subr.bf16.mxu0 0
      %2558 = vmatpush1.bf16.msra.mxu0 %v1956
      %2559 = vmatprep.subr.bf16.mxu0 0
      %2560 = vmatpush1.bf16.msra.mxu0 %v1958
      %2561 = vmatprep.subr.bf16.mxu0 0
      %2562 = vmatpush1.bf16.msra.mxu0 %v1960
      %2563 = vmatprep.subr.bf16.mxu0 0
      %2564 = vmatpush1.bf16.msra.mxu0 %v1962
      %2565 = vmatprep.subr.bf16.mxu0 0
      %2566 = vmatpush1.bf16.msra.mxu0 %v1964
      %2567 = vmatprep.subr.bf16.mxu0 0
      %2568 = vmatpush1.bf16.msra.mxu0 %v1966
      %2569 = vmatprep.subr.bf16.mxu0 0
      %2570 = vmatpush1.bf16.msra.mxu0 %v1968
      %2571 = vmatprep.subr.bf16.mxu0 0
      %2572 = vmatpush1.bf16.msra.mxu0 %v1970
      %2573 = vmatprep.subr.bf16.mxu0 0
      %2574 = vmatpush1.bf16.msra.mxu0 %v1972
      %2575 = vmatprep.mubr.bf16.mxu0 %v2430
      %2576 = vmatmul.mubr.bf16.gmra.mrb[0].mxu0 %v2429
      %v2577 = vpop.f32.mrb[0].mxu0
      %v2578 = vadd.f32 %v2537, %v2577
      %v2579 = vpop.f32.mrb[0].mxu0
      %v2580 = vpop.f32.mrb[0].mxu0
      %v2581 = vadd.f32 %v2540, %v2580
      %v2582 = vpop.f32.mrb[0].mxu0
      %2583 = vdwg.mxu0
      %2584 = vmatprep.subr.bf16.mxu0 0
      %2585 = vmatpush1.bf16.msra.mxu0 %v2006
      %2586 = vmatprep.subr.bf16.mxu0 0
      %2587 = vmatpush1.bf16.msra.mxu0 %v2008
      %2588 = vmatprep.subr.bf16.mxu0 0
      %2589 = vmatpush1.bf16.msra.mxu0 %v2010
      %2590 = vmatprep.subr.bf16.mxu0 0
      %2591 = vmatpush1.bf16.msra.mxu0 %v2012
      %2592 = vmatprep.subr.bf16.mxu0 0
      %2593 = vmatpush1.bf16.msra.mxu0 %v2014
      %2594 = vmatprep.subr.bf16.mxu0 0
      %2595 = vmatpush1.bf16.msra.mxu0 %v2016
      %2596 = vmatprep.subr.bf16.mxu0 0
      %2597 = vmatpush1.bf16.msra.mxu0 %v2018
      %2598 = vmatprep.subr.bf16.mxu0 0
      %2599 = vmatpush1.bf16.msra.mxu0 %v2020
      %2600 = vmatprep.subr.bf16.mxu0 0
      %2601 = vmatpush1.bf16.msra.mxu0 %v2022
      %2602 = vmatprep.subr.bf16.mxu0 0
      %2603 = vmatpush1.bf16.msra.mxu0 %v2024
      %2604 = vmatprep.subr.bf16.mxu0 0
      %2605 = vmatpush1.bf16.msra.mxu0 %v2026
      %2606 = vmatprep.subr.bf16.mxu0 0
      %2607 = vmatpush1.bf16.msra.mxu0 %v2028
      %2608 = vmatprep.subr.bf16.mxu0 0
      %2609 = vmatpush1.bf16.msra.mxu0 %v2030
      %2610 = vmatprep.subr.bf16.mxu0 0
      %2611 = vmatpush1.bf16.msra.mxu0 %v2032
      %2612 = vmatprep.subr.bf16.mxu0 0
      %2613 = vmatpush1.bf16.msra.mxu0 %v2034
      %2614 = vmatprep.subr.bf16.mxu0 0
      %2615 = vmatpush1.bf16.msra.mxu0 %v2036
      %2616 = vmatprep.mubr.bf16.mxu0 %v2432
      %2617 = vmatmul.mubr.bf16.gmra.mrb[0].mxu0 %v2431
      %v2618 = vpop.f32.mrb[0].mxu0
      %v2619 = vadd.f32 %v2578, %v2618
      %v2620 = vpop.f32.mrb[0].mxu0
      %v2621 = vpop.f32.mrb[0].mxu0
      %v2622 = vadd.f32 %v2581, %v2621
      %v2623 = vpop.f32.mrb[0].mxu0
      %2624 = vdwg.mxu0
      %2625 = vmatprep.subr.bf16.mxu0 0
      %2626 = vmatpush1.bf16.msra.mxu0 %v2054
      %2627 = vmatprep.subr.bf16.mxu0 0
      %2628 = vmatpush1.bf16.msra.mxu0 %v2056
      %2629 = vmatprep.subr.bf16.mxu0 0
      %2630 = vmatpush1.bf16.msra.mxu0 %v2058
      %2631 = vmatprep.subr.bf16.mxu0 0
      %2632 = vmatpush1.bf16.msra.mxu0 %v2060
      %2633 = vmatprep.subr.bf16.mxu0 0
      %2634 = vmatpush1.bf16.msra.mxu0 %v2062
      %2635 = vmatprep.subr.bf16.mxu0 0
      %2636 = vmatpush1.bf16.msra.mxu0 %v2064
      %2637 = vmatprep.subr.bf16.mxu0 0
      %2638 = vmatpush1.bf16.msra.mxu0 %v2066
      %2639 = vmatprep.subr.bf16.mxu0 0
      %2640 = vmatpush1.bf16.msra.mxu0 %v2068
      %2641 = vmatprep.subr.bf16.mxu0 0
      %2642 = vmatpush1.bf16.msra.mxu0 %v2070
      %2643 = vmatprep.subr.bf16.mxu0 0
      %2644 = vmatpush1.bf16.msra.mxu0 %v2072
      %2645 = vmatprep.subr.bf16.mxu0 0
      %2646 = vmatpush1.bf16.msra.mxu0 %v2074
      %2647 = vmatprep.subr.bf16.mxu0 0
      %2648 = vmatpush1.bf16.msra.mxu0 %v2076
      %2649 = vmatprep.subr.bf16.mxu0 0
      %2650 = vmatpush1.bf16.msra.mxu0 %v2078
      %2651 = vmatprep.subr.bf16.mxu0 0
      %2652 = vmatpush1.bf16.msra.mxu0 %v2080
      %2653 = vmatprep.subr.bf16.mxu0 0
      %2654 = vmatpush1.bf16.msra.mxu0 %v2082
      %2655 = vmatprep.subr.bf16.mxu0 0
      %2656 = vmatpush1.bf16.msra.mxu0 %v2084
      %2657 = vmatprep.mubr.bf16.mxu0 %v2434
      %2658 = vmatmul.mubr.bf16.gmra.mrb[0].mxu0 %v2433
      %v2659 = vpop.f32.mrb[0].mxu0
      %v2660 = vadd.f32 %v2619, %v2659
      %v2661 = vpop.f32.mrb[0].mxu0
      %v2662 = vpop.f32.mrb[0].mxu0
      %v2663 = vadd.f32 %v2622, %v2662
      %v2664 = vpop.f32.mrb[0].mxu0
      %2665 = vdwg.mxu0
      %2666 = vmatprep.subr.bf16.mxu0 0
      %2667 = vmatpush1.bf16.msra.mxu0 %v2118
      %2668 = vmatprep.subr.bf16.mxu0 0
      %2669 = vmatpush1.bf16.msra.mxu0 %v2120
      %2670 = vmatprep.subr.bf16.mxu0 0
      %2671 = vmatpush1.bf16.msra.mxu0 %v2122
      %2672 = vmatprep.subr.bf16.mxu0 0
      %2673 = vmatpush1.bf16.msra.mxu0 %v2124
      %2674 = vmatprep.subr.bf16.mxu0 0
      %2675 = vmatpush1.bf16.msra.mxu0 %v2126
      %2676 = vmatprep.subr.bf16.mxu0 0
      %2677 = vmatpush1.bf16.msra.mxu0 %v2128
      %2678 = vmatprep.subr.bf16.mxu0 0
      %2679 = vmatpush1.bf16.msra.mxu0 %v2130
      %2680 = vmatprep.subr.bf16.mxu0 0
      %2681 = vmatpush1.bf16.msra.mxu0 %v2132
      %2682 = vmatprep.subr.bf16.mxu0 0
      %2683 = vmatpush1.bf16.msra.mxu0 %v2134
      %2684 = vmatprep.subr.bf16.mxu0 0
      %2685 = vmatpush1.bf16.msra.mxu0 %v2136
      %2686 = vmatprep.subr.bf16.mxu0 0
      %2687 = vmatpush1.bf16.msra.mxu0 %v2138
      %2688 = vmatprep.subr.bf16.mxu0 0
      %2689 = vmatpush1.bf16.msra.mxu0 %v2140
      %2690 = vmatprep.subr.bf16.mxu0 0
      %2691 = vmatpush1.bf16.msra.mxu0 %v2142
      %2692 = vmatprep.subr.bf16.mxu0 0
      %2693 = vmatpush1.bf16.msra.mxu0 %v2144
      %2694 = vmatprep.subr.bf16.mxu0 0
      %2695 = vmatpush1.bf16.msra.mxu0 %v2146
      %2696 = vmatprep.subr.bf16.mxu0 0
      %2697 = vmatpush1.bf16.msra.mxu0 %v2148
      %2698 = vmatprep.mubr.bf16.mxu0 %v2436
      %2699 = vmatmul.mubr.bf16.gmra.mrb[0].mxu0 %v2435
      %v2700 = vpop.f32.mrb[0].mxu0
      %v2701 = vadd.f32 %v2660, %v2700
      %v2702 = vpop.f32.mrb[0].mxu0
      %v2703 = vpop.f32.mrb[0].mxu0
      %v2704 = vadd.f32 %v2663, %v2703
      %v2705 = vpop.f32.mrb[0].mxu0
      %2706 = vdwg.mxu0
      %2707 = vmatprep.subr.bf16.mxu0 0
      %2708 = vmatpush1.bf16.msra.mxu0 %v2182
      %2709 = vmatprep.subr.bf16.mxu0 0
      %2710 = vmatpush1.bf16.msra.mxu0 %v2184
      %2711 = vmatprep.subr.bf16.mxu0 0
      %2712 = vmatpush1.bf16.msra.mxu0 %v2186
      %2713 = vmatprep.subr.bf16.mxu0 0
      %2714 = vmatpush1.bf16.msra.mxu0 %v2188
      %2715 = vmatprep.subr.bf16.mxu0 0
      %2716 = vmatpush1.bf16.msra.mxu0 %v2190
      %2717 = vmatprep.subr.bf16.mxu0 0
      %2718 = vmatpush1.bf16.msra.mxu0 %v2192
      %2719 = vmatprep.subr.bf16.mxu0 0
      %2720 = vmatpush1.bf16.msra.mxu0 %v2194
      %2721 = vmatprep.subr.bf16.mxu0 0
      %2722 = vmatpush1.bf16.msra.mxu0 %v2196
      %2723 = vmatprep.subr.bf16.mxu0 0
      %2724 = vmatpush1.bf16.msra.mxu0 %v2198
      %2725 = vmatprep.subr.bf16.mxu0 0
      %2726 = vmatpush1.bf16.msra.mxu0 %v2200
      %2727 = vmatprep.subr.bf16.mxu0 0
      %2728 = vmatpush1.bf16.msra.mxu0 %v2202
      %2729 = vmatprep.subr.bf16.mxu0 0
      %2730 = vmatpush1.bf16.msra.mxu0 %v2204
      %2731 = vmatprep.subr.bf16.mxu0 0
      %2732 = vmatpush1.bf16.msra.mxu0 %v2206
      %2733 = vmatprep.subr.bf16.mxu0 0
      %2734 = vmatpush1.bf16.msra.mxu0 %v2208
      %2735 = vmatprep.subr.bf16.mxu0 0
      %2736 = vmatpush1.bf16.msra.mxu0 %v2210
      %2737 = vmatprep.subr.bf16.mxu0 0
      %2738 = vmatpush1.bf16.msra.mxu0 %v2212
      %2739 = vmatprep.mubr.bf16.mxu0 %v2438
      %2740 = vmatmul.mubr.bf16.gmra.mrb[0].mxu0 %v2437
      %v2741 = vpop.f32.mrb[0].mxu0
      %v2742 = vadd.f32 %v2701, %v2741
      %v2743 = vpop.f32.mrb[0].mxu0
      %v2744 = vpop.f32.mrb[0].mxu0
      %v2745 = vadd.f32 %v2704, %v2744
      %v2746 = vpop.f32.mrb[0].mxu0
      %2747 = vdwg.mxu0
      %2748 = vmatprep.subr.bf16.mxu0 0
      %2749 = vmatpush1.bf16.msra.mxu0 %v2230
      %2750 = vmatprep.subr.bf16.mxu0 0
      %2751 = vmatpush1.bf16.msra.mxu0 %v2232
      %2752 = vmatprep.subr.bf16.mxu0 0
      %2753 = vmatpush1.bf16.msra.mxu0 %v2234
      %2754 = vmatprep.subr.bf16.mxu0 0
      %2755 = vmatpush1.bf16.msra.mxu0 %v2236
      %2756 = vmatprep.subr.bf16.mxu0 0
      %2757 = vmatpush1.bf16.msra.mxu0 %v2238
      %2758 = vmatprep.subr.bf16.mxu0 0
      %2759 = vmatpush1.bf16.msra.mxu0 %v2240
      %2760 = vmatprep.subr.bf16.mxu0 0
      %2761 = vmatpush1.bf16.msra.mxu0 %v2242
      %2762 = vmatprep.subr.bf16.mxu0 0
      %2763 = vmatpush1.bf16.msra.mxu0 %v2244
      %2764 = vmatprep.subr.bf16.mxu0 0
      %2765 = vmatpush1.bf16.msra.mxu0 %v2246
      %2766 = vmatprep.subr.bf16.mxu0 0
      %2767 = vmatpush1.bf16.msra.mxu0 %v2248
      %2768 = vmatprep.subr.bf16.mxu0 0
      %2769 = vmatpush1.bf16.msra.mxu0 %v2250
      %2770 = vmatprep.subr.bf16.mxu0 0
      %2771 = vmatpush1.bf16.msra.mxu0 %v2252
      %2772 = vmatprep.subr.bf16.mxu0 0
      %2773 = vmatpush1.bf16.msra.mxu0 %v2254
      %2774 = vmatprep.subr.bf16.mxu0 0
      %2775 = vmatpush1.bf16.msra.mxu0 %v2256
      %2776 = vmatprep.subr.bf16.mxu0 0
      %2777 = vmatpush1.bf16.msra.mxu0 %v2258
      %2778 = vmatprep.subr.bf16.mxu0 0
      %2779 = vmatpush1.bf16.msra.mxu0 %v2260
      %2780 = vmatprep.mubr.bf16.mxu0 %v2440
      %2781 = vmatmul.mubr.bf16.gmra.mrb[0].mxu0 %v2439
      %v2782 = vpop.f32.mrb[0].mxu0
      %v2783 = vadd.f32 %v2742, %v2782
      %v2784 = vpop.f32.mrb[0].mxu0
      %v2785 = vpop.f32.mrb[0].mxu0
      %v2786 = vadd.f32 %v2745, %v2785
      %v2787 = vpop.f32.mrb[0].mxu0
      %2788 = vdwg.mxu0
      %2789 = vmatprep.subr.bf16.mxu0 0
      %2790 = vmatpush1.bf16.msra.mxu0 %v2294
      %2791 = vmatprep.subr.bf16.mxu0 0
      %2792 = vmatpush1.bf16.msra.mxu0 %v2296
      %2793 = vmatprep.subr.bf16.mxu0 0
      %2794 = vmatpush1.bf16.msra.mxu0 %v2298
      %2795 = vmatprep.subr.bf16.mxu0 0
      %2796 = vmatpush1.bf16.msra.mxu0 %v2300
      %2797 = vmatprep.subr.bf16.mxu0 0
      %2798 = vmatpush1.bf16.msra.mxu0 %v2302
      %2799 = vmatprep.subr.bf16.mxu0 0
      %2800 = vmatpush1.bf16.msra.mxu0 %v2304
      %2801 = vmatprep.subr.bf16.mxu0 0
      %2802 = vmatpush1.bf16.msra.mxu0 %v2306
      %2803 = vmatprep.subr.bf16.mxu0 0
      %2804 = vmatpush1.bf16.msra.mxu0 %v2308
      %2805 = vmatprep.subr.bf16.mxu0 0
      %2806 = vmatpush1.bf16.msra.mxu0 %v2310
      %2807 = vmatprep.subr.bf16.mxu0 0
      %2808 = vmatpush1.bf16.msra.mxu0 %v2312
      %2809 = vmatprep.subr.bf16.mxu0 0
      %2810 = vmatpush1.bf16.msra.mxu0 %v2314
      %2811 = vmatprep.subr.bf16.mxu0 0
      %2812 = vmatpush1.bf16.msra.mxu0 %v2316
      %2813 = vmatprep.subr.bf16.mxu0 0
      %2814 = vmatpush1.bf16.msra.mxu0 %v2318
      %2815 = vmatprep.subr.bf16.mxu0 0
      %2816 = vmatpush1.bf16.msra.mxu0 %v2320
      %2817 = vmatprep.subr.bf16.mxu0 0
      %2818 = vmatpush1.bf16.msra.mxu0 %v2322
      %2819 = vmatprep.subr.bf16.mxu0 0
      %2820 = vmatpush1.bf16.msra.mxu0 %v2324
      %2821 = vmatprep.mubr.bf16.mxu0 %v2442
      %2822 = vmatmul.mubr.bf16.gmra.mrb[0].mxu0 %v2441
      %v2823 = vpop.f32.mrb[0].mxu0
      %v2824 = vadd.f32 %v2783, %v2823
      %v2825 = vpop.f32.mrb[0].mxu0
      %v2826 = vpop.f32.mrb[0].mxu0
      %v2827 = vadd.f32 %v2786, %v2826
      %v2828 = vpop.f32.mrb[0].mxu0
      %2829 = vdwg.mxu0
      %v2830 = vpack.c.bf16 %v2824, %v2824
      %v2831 = vld [vmem:[%s6] sm:$0xff]
      %v2832 = vld [vmem:[%s6 + $0x8] sm:$0xff]
      %v2833 = vld [vmem:[%s6 + $0x10] sm:$0xff]
      %v2834 = vld [vmem:[%s6 + $0x18] sm:$0xff]
      %v2835 = vld [vmem:[%s6 + $0x20] sm:$0xff]
      %v2836 = vld [vmem:[%s6 + $0x28] sm:$0xff]
      %v2837 = vld [vmem:[%s6 + $0x30] sm:$0xff]
      %v2838 = vld [vmem:[%s6 + $0x38] sm:$0xff]
      %v2847 = vunpack.c.l.b16 %v2831
      %v2848 = vunpack.c.h.b16 %v2831
      %v2849 = vunpack.c.l.b16 %v2832
      %v2850 = vunpack.c.h.b16 %v2832
      %v2851 = vunpack.c.l.b16 %v2833
      %v2852 = vunpack.c.h.b16 %v2833
      %v2853 = vunpack.c.l.b16 %v2834
      %v2854 = vunpack.c.h.b16 %v2834
      %v2855 = vunpack.c.l.b16 %v2835
      %v2856 = vunpack.c.h.b16 %v2835
      %v2857 = vunpack.c.l.b16 %v2836
      %v2858 = vunpack.c.h.b16 %v2836
      %v2859 = vunpack.c.l.b16 %v2837
      %v2860 = vunpack.c.h.b16 %v2837
      %v2861 = vunpack.c.l.b16 %v2838
      %v2862 = vunpack.c.h.b16 %v2838
      %v2863 = vpack.c.b16 %v2849, %v2847
      %v2864 = vpack.c.b16 %v2850, %v2848
      %v2865 = vpack.c.b16 %v2853, %v2851
      %v2866 = vpack.c.b16 %v2854, %v2852
      %v2867 = vpack.c.b16 %v2857, %v2855
      %v2868 = vpack.c.b16 %v2858, %v2856
      %v2869 = vpack.c.b16 %v2861, %v2859
      %v2870 = vpack.c.b16 %v2862, %v2860
      %v2880 = vsel %vm1478, %v2830, 0
      %2882 = vmatprep.subr.bf16.mxu0 %v2864
      %2883 = vmatpush1.bf16.msra.mxu0 %v2863
      %2884 = vmatprep.subr.bf16.mxu0 %v2866
      %2885 = vmatpush1.bf16.msra.mxu0 %v2865
      %2886 = vmatprep.subr.bf16.mxu0 %v2868
      %2887 = vmatpush1.bf16.msra.mxu0 %v2867
      %2888 = vmatprep.subr.bf16.mxu0 %v2870
      %2889 = vmatpush1.bf16.msra.mxu0 %v2869
      %2890 = vmatprep.subr.bf16.mxu0 0
      %2891 = vmatpush1.bf16.msra.mxu0 0
      %2892 = vmatprep.subr.bf16.mxu0 0
      %2893 = vmatpush1.bf16.msra.mxu0 0
      %2894 = vmatprep.subr.bf16.mxu0 0
      %2895 = vmatpush1.bf16.msra.mxu0 0
      %2896 = vmatprep.subr.bf16.mxu0 0
      %2897 = vmatpush1.bf16.msra.mxu0 0
      %2898 = vmatprep.subr.bf16.mxu0 0
      %2899 = vmatpush1.bf16.msra.mxu0 0
      %2900 = vmatprep.subr.bf16.mxu0 0
      %2901 = vmatpush1.bf16.msra.mxu0 0
      %2902 = vmatprep.subr.bf16.mxu0 0
      %2903 = vmatpush1.bf16.msra.mxu0 0
      %2904 = vmatprep.subr.bf16.mxu0 0
      %2905 = vmatpush1.bf16.msra.mxu0 0
      %2906 = vmatprep.subr.bf16.mxu0 0
      %2907 = vmatpush1.bf16.msra.mxu0 0
      %2908 = vmatprep.subr.bf16.mxu0 0
      %2909 = vmatpush1.bf16.msra.mxu0 0
      %2910 = vmatprep.subr.bf16.mxu0 0
      %2911 = vmatpush1.bf16.msra.mxu0 0
      %2912 = vmatprep.subr.bf16.mxu0 0
      %2913 = vmatpush1.bf16.msra.mxu0 0
      %2914 = vmatprep.mubr.bf16.mxu0 0
      %2915 = vmatmul.mubr.bf16.gmra.mrb[0].mxu0 %v2880
      %v2916 = vpop.f32.mrb[0].mxu0
      %v2917 = vadd.f32 %v1599, %v2916
      %v2918 = vpop.f32.mrb[0].mxu0
      %v2919 = vadd.f32 %v1601, %v2918
      %v2920 = vpop.f32.mrb[0].mxu0
      %v2921 = vpop.f32.mrb[0].mxu0
      %2922 = vdwg.mxu0
      %v2925 = vcombine.low %v2917, %v2919
      %2927 = vst [vmem:[%s313] sm:$0xff] %v2925
      %vm2928 = vcmask 523268
      %2929 = vst.msk [vmem:[%s318 - $0x4] sm:$0xf0] %vm2928, %v2824
      %2930 = vst.msk [vmem:[%s318 + $0x4] sm:$0xff] %vm1478, %v2827
      %p2931 = scmp.lt.s32.totalorder %s20, 1
      %s2932 = scalar_select %p2931, %s20, 1
      %s2933 = smul.addr %s2932, 2
      %s2934 = smul.addr %s2933, 4
      %s2935 = scalar_lea.vmem %s7, %s2934
      %p2936 = scmp.lt.s32.totalorder %s20, 1
      %s2937 = scalar_select %p2936, %s20, 1
      %s2938 = smul.addr %s2937, 2
      %s2939 = smul.addr %s2938, 8
      %s2940 = scalar_lea.vmem %s8, %s2939
      // Predicated region
      $region49: #{octave_conv2_forward.1} parent=47 // pred_check
        %p2941 = pneg %p190
      $region50: #{octave_conv2_forward.1} parent=47 // pred_check_branch
        %2943 = sbr.rel (%p2941) target = $region52
      $region51: #{octave_conv2_forward.1} parent=47 // pred_region
        _
      $region52: #{octave_conv2_forward.1} parent=47 // pred_fallthru
        _
      // Predicated region
      $region53: #{octave_conv2_forward.1} parent=47 // pred_check
        %p2944 = pneg %p216
      $region54: #{octave_conv2_forward.1} parent=47 // pred_check_branch
        %2946 = sbr.rel (%p2944) target = $region56
      $region55: #{octave_conv2_forward.1} parent=47 // pred_region
        _
      $region56: #{octave_conv2_forward.1} parent=47 // pred_fallthru
        _
    $region48: #{octave_conv2_forward.1} parent=5 // pred_fallthru
      _
    %p2947 = scmp.le.s32.totalorder 2, %s15
    // Predicated region
    $region57: #{octave_conv2_forward.1} parent=5 // pred_check
      %p2948 = pneg %p2947
    $region58: #{octave_conv2_forward.1} parent=5 // pred_check_branch
      %2950 = sbr.rel (%p2948) target = $region60
    $region59: #{octave_conv2_forward.1} parent=5 // pred_region
      %s2951 = ssub.s32 %s15, 2
      // Predicated region
      $region61: #{octave_conv2_forward.1} parent=59 // pred_check
        %p2952 = pneg %p196
      $region62: #{octave_conv2_forward.1} parent=59 // pred_check_branch
        %2954 = sbr.rel (%p2952) target = $region64
      $region63: #{octave_conv2_forward.1} parent=59 // pred_region
        %p2955 = scmp.lt.s32.totalorder %s21, 1
        %s2956 = scalar_select %p2955, %s21, 1
        %s2957 = smul.addr %s2956, 2
        %s2958 = smul.addr %s2957, 4
        %s2959 = scalar_lea.vmem %s7, %s2958
      $region64: #{octave_conv2_forward.1} parent=59 // pred_fallthru
        _
      // Predicated region
      $region65: #{octave_conv2_forward.1} parent=59 // pred_check
        %p2960 = pneg %p222
      $region66: #{octave_conv2_forward.1} parent=59 // pred_check_branch
        %2962 = sbr.rel (%p2960) target = $region68
      $region67: #{octave_conv2_forward.1} parent=59 // pred_region
        %p2963 = scmp.lt.s32.totalorder %s21, 1
        %s2964 = scalar_select %p2963, %s21, 1
        %s2965 = smul.addr %s2964, 2
        %s2966 = smul.addr %s2965, 8
        %s2967 = scalar_lea.vmem %s8, %s2966
      $region68: #{octave_conv2_forward.1} parent=59 // pred_fallthru
        _
    $region60: #{octave_conv2_forward.1} parent=5 // pred_fallthru
      _
  $region6: #{octave_conv2_forward.1} parent=0 // loop_footer
    %s19 = sadd.s32 1, %s15
  $region7: #{octave_conv2_forward.1} parent=0 // loop_footer_branch
    %14 = sbr.rel target = $region3
  $region8: #{octave_conv2_forward.1} parent=0 // loop_exit
    _

</llo_original>
